<compile_context>
chip_gen: v6e
topology: v6e:2x2x1
jax: 0.10.0
libtpu: 0.0.40
codegen_flags: <defaults>
</compile_context>

<pallas_src>
from functools import partial

import jax
import jax.numpy as jnp
from jax.experimental import pallas as pl
from jax.experimental.pallas import tpu as pltpu


C_PAD = 128          # lane-dense output width (classes padded 10 -> 128)
NEG_BIG = -1e30      # bias value for padded class lanes -> exp() underflows to 0


def mlp_kernel(x_ref, w1_ref, b1_ref, w2_ref, b2_ref, o_ref):
    # fc1: (TB, 784)bf16 @ (784, 32)bf16 -> f32 acc, + (1, 32)f32 bias
    x = x_ref[...]
    h = jnp.dot(x, w1_ref[...], preferred_element_type=jnp.float32) + b1_ref[...]
    # ReLU (f32 on the VPU)
    h = jnp.maximum(h, 0.0)
    # fc2: (TB, 32)f32 @ (32, 128)f32 + (1, 128)f32.
    # Padded class columns have weight 0 and bias -1e30, so after the max-subtract
    # their exp() is exactly 0 and they do not perturb the softmax over the 10 real classes.
    logits = jnp.dot(h, w2_ref[...], preferred_element_type=jnp.float32) + b2_ref[...]
    # Numerically stable softmax along the class (last) dim == nn.Softmax(dim=1) on 2-D input.
    m = jnp.max(logits, axis=-1, keepdims=True)
    e = jnp.exp(logits - m)
    denom = jnp.sum(e, axis=-1, keepdims=True)
    o_ref[...] = (e * pl.reciprocal(denom, approx=True)).astype(o_ref.dtype)


def _round_up(n, m):
    return ((n + m - 1) // m) * m


@partial(jax.jit, static_argnames=("tb",))
def model_2_forward(x, w1, b1, w2, b2, *, tb=1024):
    """x: (B, 784) f32; w1: (784, 32); b1: (1, 32); w2: (32, 10); b2: (1, 10)."""
    B, D_in = x.shape
    H = w1.shape[1]           # 32
    C = w2.shape[1]           # 10

    # --- batch tiling (TB rows per grid step; pad B up to a multiple of TB) ---
    tb = min(tb, _round_up(B, 16))        # multiple of 16: clean bf16 sublane tiling
    B_pad = _round_up(B, tb)
    if B_pad != B:
        x = jnp.pad(x, ((0, B_pad - B), (0, 0)))
    grid = (B_pad // tb,)

    # --- narrow dtype for the bandwidth-dominant operands (fc1) ---
    x_bf16 = x.astype(jnp.bfloat16)
    w1_bf16 = w1.astype(jnp.bfloat16)
    b1_f32 = b1.astype(jnp.float32)

    # --- lane-dense output: pad the class dim of fc2 to 128 (done once, cheap) ---
    w2_p = jnp.pad(w2.astype(jnp.float32), ((0, 0), (0, C_PAD - C)))
    b2_p = jnp.pad(b2.astype(jnp.float32), ((0, 0), (0, C_PAD - C)),
                   constant_values=NEG_BIG)

    bpe_bf16, bpe_f32 = 2, 4
    cost = pl.CostEstimate(
        flops=2 * B_pad * (D_in * H + H * C_PAD),
        transcendentals=B_pad * C_PAD,                       # exp
        bytes_accessed=(B_pad * D_in * bpe_bf16              # x read
                        + D_in * H * bpe_bf16                # w1
                        + (H + H * C_PAD + C_PAD) * bpe_f32  # b1, w2, b2
                        + B_pad * C_PAD * bpe_f32),          # output write
    )

    out_padded = pl.pallas_call(
        mlp_kernel,
        out_shape=jax.ShapeDtypeStruct((B_pad, C_PAD), jnp.float32),
        grid_spec=pl.GridSpec(
            grid=grid,
            in_specs=[
                pl.BlockSpec((tb, D_in), lambda i: (i, 0)),     # x: tiled over batch
                pl.BlockSpec((D_in, H),  lambda i: (0, 0)),     # w1: resident
                pl.BlockSpec((1, H),     lambda i: (0, 0)),     # b1: resident
                pl.BlockSpec((H, C_PAD), lambda i: (0, 0)),     # w2 (padded): resident
                pl.BlockSpec((1, C_PAD), lambda i: (0, 0)),     # b2 (padded): resident
            ],
            out_specs=pl.BlockSpec((tb, C_PAD), lambda i: (i, 0)),
        ),
        compiler_params=pltpu.CompilerParams(
            dimension_semantics=("parallel",),          # megacore-shardable batch axis
            vmem_limit_bytes=48 * 1024 * 1024,          # headroom, still < v7x physical
        ),
        cost_estimate=cost,
    )(x_bf16, w1_bf16, b1_f32, w2_p, b2_p)

    # TODO(synk): optional zero-pad of D_in 784->896 skipped — per-call x copy would
    # cost more HBM traffic than the masked lane chunk it removes.
    return out_padded[:B, :C]


def reference_forward_bf16_fc1(x, w1, b1, w2, b2):
    """Apples-to-apples reference: same bf16 fc1 inputs, f32 accumulate/tail."""
    h = jnp.dot(x.astype(jnp.bfloat16), w1.astype(jnp.bfloat16),
                preferred_element_type=jnp.float32) + b1
    h = jnp.maximum(h, 0.0)
    logits = h @ w2 + b2
    return jax.nn.softmax(logits, axis=-1)


def reference_forward_f32(x, w1, b1, w2, b2):
    h = jnp.maximum(x @ w1 + b1, 0.0)
    logits = h @ w2 + b2
    return jax.nn.softmax(logits, axis=-1)


if __name__ == "__main__":
    key = jax.random.PRNGKey(0)
    k_x, k_w1, k_b1, k_w2, k_b2 = jax.random.split(key, 5)

    B, D_IN, H, C = 256, 784, 32, 10   # MNIST-flattened input as implied by the module

    x = jax.random.normal(k_x, (B, D_IN), dtype=jnp.float32)
    # Deterministic PyTorch-like uniform init, stored as (in, out)
    w1 = jax.random.uniform(k_w1, (D_IN, H), jnp.float32, -1.0, 1.0) / jnp.sqrt(D_IN)
    b1 = jax.random.uniform(k_b1, (1, H),    jnp.float32, -1.0, 1.0) / jnp.sqrt(D_IN)
    w2 = jax.random.uniform(k_w2, (H, C),    jnp.float32, -1.0, 1.0) / jnp.sqrt(H)
    b2 = jax.random.uniform(k_b2, (1, C),    jnp.float32, -1.0, 1.0) / jnp.sqrt(H)

    # tb=128 so the demo exercises a multi-step batch grid (256/128 = 2 steps).
    out = model_2_forward(x, w1, b1, w2, b2, tb=128)
    out = jax.block_until_ready(out)

    ref_bf16 = reference_forward_bf16_fc1(x, w1, b1, w2, b2)
    ref_f32 = reference_forward_f32(x, w1, b1, w2, b2)

    assert out.shape == (B, C)
    # Tight check vs. a reference using the same bf16 fc1 (approx-recip slack only).
    assert jnp.allclose(out, ref_bf16, atol=5e-3, rtol=5e-3), "mismatch vs bf16-fc1 reference"
    # Coarser check vs. the pure-f32 reference (bf16 rounding of x/w1).
    assert jnp.allclose(out, ref_f32, atol=3e-2, rtol=3e-2), "mismatch vs f32 reference"
    # Softmax rows sum to 1 (loosened for approx reciprocal).
    assert jnp.allclose(jnp.sum(out, axis=-1), 1.0, atol=5e-3), "softmax rows must sum to 1"

    print("KERNEL_OK")
</pallas_src>

<mosaic_0001>
module attributes {stable_mosaic.version = 11 : i64} {
  func.func @mlp_kernel(%arg0: i32, %arg1: memref<128x784xbf16, #tpu.memory_space<vmem>>, %arg2: memref<784x32xbf16, #tpu.memory_space<vmem>>, %arg3: memref<1x32xf32, #tpu.memory_space<vmem>>, %arg4: memref<32x128xf32, #tpu.memory_space<vmem>>, %arg5: memref<1x128xf32, #tpu.memory_space<vmem>>, %arg6: memref<128x128xf32, #tpu.memory_space<vmem>>) attributes {dimension_semantics = [#tpu.dimension_semantics<parallel>], iteration_bounds = array<i64: 2>, scalar_prefetch = 0 : i64, scratch_operands = 0 : i64, tpu.core_type = #tpu.core_type<tc>, window_params = [{transform_indices = @transform_0, window_bounds = array<i64: 128, 784>}, {pipeline_mode = #tpu.pipeline_mode<synchronous>, transform_indices = @transform_1, window_bounds = array<i64: 784, 32>}, {pipeline_mode = #tpu.pipeline_mode<synchronous>, transform_indices = @transform_2, window_bounds = array<i64: 1, 32>}, {pipeline_mode = #tpu.pipeline_mode<synchronous>, transform_indices = @transform_3, window_bounds = array<i64: 32, 128>}, {pipeline_mode = #tpu.pipeline_mode<synchronous>, transform_indices = @transform_4, window_bounds = array<i64: 1, 128>}, {transform_indices = @transform_5, window_bounds = array<i64: 128, 128>}]} {
    %c0 = arith.constant 0 : index
    %c0_0 = arith.constant 0 : index
    %0 = vector.load %arg1[%c0, %c0_0] : memref<128x784xbf16, #tpu.memory_space<vmem>>, vector<128x784xbf16>
    %c0_1 = arith.constant 0 : index
    %c0_2 = arith.constant 0 : index
    %1 = vector.load %arg2[%c0_1, %c0_2] : memref<784x32xbf16, #tpu.memory_space<vmem>>, vector<784x32xbf16>
    %cst = arith.constant dense<0.000000e+00> : vector<128x32xf32>
    %2 = tpu.matmul %0, %1, %cst {dimension_numbers = #tpu.dot_dimension_numbers<[1], [0], [0], [1], [0, 0, 1, 1], [], []>} : vector<128x784xbf16>, vector<784x32xbf16>, vector<128x32xf32> -> vector<128x32xf32>
    %c0_3 = arith.constant 0 : index
    %c0_4 = arith.constant 0 : index
    %3 = vector.load %arg3[%c0_3, %c0_4] : memref<1x32xf32, #tpu.memory_space<vmem>>, vector<1x32xf32>
    %4 = vector.broadcast %3 : vector<1x32xf32> to vector<128x32xf32>
    %5 = arith.addf %2, %4 : vector<128x32xf32>
    %cst_5 = arith.constant 0.000000e+00 : f32
    %6 = vector.broadcast %cst_5 : f32 to vector<128x32xf32>
    %7 = arith.maximumf %5, %6 : vector<128x32xf32>
    %c0_6 = arith.constant 0 : index
    %c0_7 = arith.constant 0 : index
    %8 = vector.load %arg4[%c0_6, %c0_7] : memref<32x128xf32, #tpu.memory_space<vmem>>, vector<32x128xf32>
    %cst_8 = arith.constant dense<0.000000e+00> : vector<128x128xf32>
    %9 = tpu.matmul %7, %8, %cst_8 {dimension_numbers = #tpu.dot_dimension_numbers<[1], [0], [0], [1], [0, 0, 1, 1], [], []>} : vector<128x32xf32>, vector<32x128xf32>, vector<128x128xf32> -> vector<128x128xf32>
    %c0_9 = arith.constant 0 : index
    %c0_10 = arith.constant 0 : index
    %10 = vector.load %arg5[%c0_9, %c0_10] : memref<1x128xf32, #tpu.memory_space<vmem>>, vector<1x128xf32>
    %11 = vector.broadcast %10 : vector<1x128xf32> to vector<128x128xf32>
    %12 = arith.addf %9, %11 : vector<128x128xf32>
    %cst_11 = arith.constant dense<0xFF800000> : vector<128xf32>
    %13 = vector.multi_reduction <maximumf>, %12, %cst_11 [1] : vector<128x128xf32> to vector<128xf32>
    %14 = vector.shape_cast %13 : vector<128xf32> to vector<128x1xf32>
    %15 = vector.broadcast %14 : vector<128x1xf32> to vector<128x128xf32>
    %16 = arith.subf %12, %15 : vector<128x128xf32>
    %17 = math.exp %16 : vector<128x128xf32>
    %cst_12 = arith.constant dense<0.000000e+00> : vector<128xf32>
    %18 = vector.multi_reduction <add>, %17, %cst_12 [1] : vector<128x128xf32> to vector<128xf32>
    %19 = vector.shape_cast %18 : vector<128xf32> to vector<128x1xf32>
    %20 = tpu.reciprocal %19 {approx = true} : vector<128x1xf32> -> vector<128x1xf32>
    %21 = vector.broadcast %20 : vector<128x1xf32> to vector<128x128xf32>
    %22 = arith.mulf %17, %21 : vector<128x128xf32>
    %c0_13 = arith.constant 0 : index
    %c0_14 = arith.constant 0 : index
    %23 = vector.load %arg6[%c0_13, %c0_14] : memref<128x128xf32, #tpu.memory_space<vmem>>, vector<128x128xf32>
    tpu.vector_store %arg6[%c0_13, %c0_14], %22 {strides = array<i32>} : memref<128x128xf32, #tpu.memory_space<vmem>>, vector<128x128xf32>,
    return
  }
  func.func @transform_0(%arg0: i32) -> (i32, i32) {
    %c0_i32 = arith.constant 0 : i32
    %c0_i32_0 = arith.constant 0 : i32
    return %arg0, %c0_i32 : i32, i32
  }
  func.func @transform_1(%arg0: i32) -> (i32, i32) {
    %c0_i32 = arith.constant 0 : i32
    %c0_i32_0 = arith.constant 0 : i32
    %c0_i32_1 = arith.constant 0 : i32
    return %c0_i32, %c0_i32_0 : i32, i32
  }
  func.func @transform_2(%arg0: i32) -> (i32, i32) {
    %c0_i32 = arith.constant 0 : i32
    %c0_i32_0 = arith.constant 0 : i32
    %c0_i32_1 = arith.constant 0 : i32
    return %c0_i32, %c0_i32_0 : i32, i32
  }
  func.func @transform_3(%arg0: i32) -> (i32, i32) {
    %c0_i32 = arith.constant 0 : i32
    %c0_i32_0 = arith.constant 0 : i32
    %c0_i32_1 = arith.constant 0 : i32
    return %c0_i32, %c0_i32_0 : i32, i32
  }
  func.func @transform_4(%arg0: i32) -> (i32, i32) {
    %c0_i32 = arith.constant 0 : i32
    %c0_i32_0 = arith.constant 0 : i32
    %c0_i32_1 = arith.constant 0 : i32
    return %c0_i32, %c0_i32_0 : i32, i32
  }
  func.func @transform_5(%arg0: i32) -> (i32, i32) {
    %c0_i32 = arith.constant 0 : i32
    %c0_i32_0 = arith.constant 0 : i32
    return %arg0, %c0_i32 : i32, i32
  }
}

</mosaic_0001>

<llo_original>
// kernel: model_2_forward.1
$region0: #{model_2_forward.1}
  #allocation0 [shape = 'u32[]', space=smem, size = 0x4, offset = 0x4, fixed_abs, tag = 'smem constant byte address 0x4 - core index']
  #allocation1 [shape = 'u32[144,128]{1,0:T(1,128)}', space=vmem, size = 0x12000, scoped, tag = 'internal scratch']
  %s0 = inlined_call_operand.vmem [shape: bf16[256,784], index: 0, kind: input, shape index: {}]
  %s1 = inlined_call_operand.vmem [shape: bf16[784,32], index: 1, kind: input, shape index: {}]
  %s2 = inlined_call_operand.vmem [shape: f32[1,32], index: 2, kind: input, shape index: {}]
  %s3 = inlined_call_operand.vmem [shape: f32[32,128], index: 3, kind: input, shape index: {}]
  %s4 = inlined_call_operand.vmem [shape: f32[1,128], index: 4, kind: input, shape index: {}]
  %s5 = inlined_call_operand.vmem [shape: f32[256,128], index: 5, kind: output, shape index: {}]
  %s6 = sld [smem:[#allocation0]]
  $region53: #{model_2_forward.1} parent=0
    _
  %s8 = ssub.s32 1, %s6
  %s9 = scalar_select 0, %s8, %s6
  loop: start=0, step=1, limit=4
  $region2: #{model_2_forward.1} parent=0 // loop_pre_header
    _
  $region3: #{model_2_forward.1} parent=0 // loop_header
    %s11 = sphi 0, %s15
    %p12 = scmp.ge.s32.totalorder %s11, 4
    %s21 = sphi 0, %s23
    %s24 = sphi 0, %s21
    %s25 = sphi 0, %s24
    %s41 = sphi 0, %s25
    %s45 = sphi 0, %s45
    %s47 = sphi 0, %s45
    %s48 = sphi 0, %s47
    %s62 = sphi 0, %s48
    %s66 = sphi 0, %s66
    %s68 = sphi 0, %s66
    %s69 = sphi 0, %s68
    %s83 = sphi 0, %s69
    %s87 = sphi 0, %s87
    %s89 = sphi 0, %s87
    %s90 = sphi 0, %s89
    %s104 = sphi 0, %s90
    %s108 = sphi 0, %s108
    %s110 = sphi 0, %s108
    %s111 = sphi 0, %s110
    %s125 = sphi 0, %s111
    %s131 = sphi 0, %s133
    %s134 = sphi 0, %s131
    %s135 = sphi 0, %s134
    %s151 = sphi 0, %s135
  $region4: #{model_2_forward.1} parent=0 // loop_header_branch
    %14 = sbr.rel (%p12) target = $region8
  $region5: #{model_2_forward.1} parent=0 // loop_body
    %s16 = ssub.s32 %s11, 1
    %s17 = ssub.s32 %s11, 2
    %s18 = sadd.s32 %s11, 1
    %s19 = ssub.s32 %s11, %s18
    %p20 = scmp.eq.s32.totalorder %s19, 0
    %s22 = sadd.s32 %s21, 1
    %s23 = scalar_select %p20, %s21, %s22
    %p26 = pneg %p20
    %p27 = scmp.eq.s32.totalorder %s11, 1
    %p28 = por %p26, %p27
    %p29 = scmp.ne.s32.totalorder %s21, %s24
    %p30 = scmp.eq.s32.totalorder %s11, 0
    %p31 = por %p29, %p30
    %p32 = scmp.ne.s32.totalorder %s21, %s24
    %p33 = scmp.eq.s32.totalorder %s16, 1
    %p34 = por %p32, %p33
    %p35 = scmp.ne.s32.totalorder %s24, %s25
    %p36 = scmp.eq.s32.totalorder %s16, 0
    %p37 = por %p35, %p36
    %p38 = scmp.ne.s32.totalorder %s24, %s25
    %p39 = scmp.eq.s32.totalorder %s17, 1
    %p40 = por %p38, %p39
    %p42 = scmp.ne.s32.totalorder %s25, %s41
    %p43 = scmp.eq.s32.totalorder %s17, 0
    %p44 = por %p42, %p43
    %s46 = sadd.s32 %s45, 1
    %p49 = scmp.eq.s32.totalorder %s11, 1
    %p50 = scmp.ne.s32.totalorder %s45, %s47
    %p51 = scmp.eq.s32.totalorder %s11, 0
    %p52 = por %p50, %p51
    %p53 = scmp.ne.s32.totalorder %s45, %s47
    %p54 = scmp.eq.s32.totalorder %s16, 1
    %p55 = por %p53, %p54
    %p56 = scmp.ne.s32.totalorder %s47, %s48
    %p57 = scmp.eq.s32.totalorder %s16, 0
    %p58 = por %p56, %p57
    %p59 = scmp.ne.s32.totalorder %s47, %s48
    %p60 = scmp.eq.s32.totalorder %s17, 1
    %p61 = por %p59, %p60
    %p63 = scmp.ne.s32.totalorder %s48, %s62
    %p64 = scmp.eq.s32.totalorder %s17, 0
    %p65 = por %p63, %p64
    %s67 = sadd.s32 %s66, 1
    %p70 = scmp.eq.s32.totalorder %s11, 1
    %p71 = scmp.ne.s32.totalorder %s66, %s68
    %p72 = scmp.eq.s32.totalorder %s11, 0
    %p73 = por %p71, %p72
    %p74 = scmp.ne.s32.totalorder %s66, %s68
    %p75 = scmp.eq.s32.totalorder %s16, 1
    %p76 = por %p74, %p75
    %p77 = scmp.ne.s32.totalorder %s68, %s69
    %p78 = scmp.eq.s32.totalorder %s16, 0
    %p79 = por %p77, %p78
    %p80 = scmp.ne.s32.totalorder %s68, %s69
    %p81 = scmp.eq.s32.totalorder %s17, 1
    %p82 = por %p80, %p81
    %p84 = scmp.ne.s32.totalorder %s69, %s83
    %p85 = scmp.eq.s32.totalorder %s17, 0
    %p86 = por %p84, %p85
    %s88 = sadd.s32 %s87, 1
    %p91 = scmp.eq.s32.totalorder %s11, 1
    %p92 = scmp.ne.s32.totalorder %s87, %s89
    %p93 = scmp.eq.s32.totalorder %s11, 0
    %p94 = por %p92, %p93
    %p95 = scmp.ne.s32.totalorder %s87, %s89
    %p96 = scmp.eq.s32.totalorder %s16, 1
    %p97 = por %p95, %p96
    %p98 = scmp.ne.s32.totalorder %s89, %s90
    %p99 = scmp.eq.s32.totalorder %s16, 0
    %p100 = por %p98, %p99
    %p101 = scmp.ne.s32.totalorder %s89, %s90
    %p102 = scmp.eq.s32.totalorder %s17, 1
    %p103 = por %p101, %p102
    %p105 = scmp.ne.s32.totalorder %s90, %s104
    %p106 = scmp.eq.s32.totalorder %s17, 0
    %p107 = por %p105, %p106
    %s109 = sadd.s32 %s108, 1
    %p112 = scmp.eq.s32.totalorder %s11, 1
    %p113 = scmp.ne.s32.totalorder %s108, %s110
    %p114 = scmp.eq.s32.totalorder %s11, 0
    %p115 = por %p113, %p114
    %p116 = scmp.ne.s32.totalorder %s108, %s110
    %p117 = scmp.eq.s32.totalorder %s16, 1
    %p118 = por %p116, %p117
    %p119 = scmp.ne.s32.totalorder %s110, %s111
    %p120 = scmp.eq.s32.totalorder %s16, 0
    %p121 = por %p119, %p120
    %p122 = scmp.ne.s32.totalorder %s110, %s111
    %p123 = scmp.eq.s32.totalorder %s17, 1
    %p124 = por %p122, %p123
    %p126 = scmp.ne.s32.totalorder %s111, %s125
    %p127 = scmp.eq.s32.totalorder %s17, 0
    %p128 = por %p126, %p127
    %s129 = ssub.s32 %s11, %s18
    %p130 = scmp.eq.s32.totalorder %s129, 0
    %s132 = sadd.s32 %s131, 1
    %s133 = scalar_select %p130, %s131, %s132
    %p136 = pneg %p130
    %p137 = scmp.eq.s32.totalorder %s11, 1
    %p138 = por %p136, %p137
    %p139 = scmp.ne.s32.totalorder %s131, %s134
    %p140 = scmp.eq.s32.totalorder %s11, 0
    %p141 = por %p139, %p140
    %p142 = scmp.ne.s32.totalorder %s131, %s134
    %p143 = scmp.eq.s32.totalorder %s16, 1
    %p144 = por %p142, %p143
    %p145 = scmp.ne.s32.totalorder %s134, %s135
    %p146 = scmp.eq.s32.totalorder %s16, 0
    %p147 = por %p145, %p146
    %p148 = scmp.ne.s32.totalorder %s134, %s135
    %p149 = scmp.eq.s32.totalorder %s17, 1
    %p150 = por %p148, %p149
    %p152 = scmp.ne.s32.totalorder %s135, %s151
    %p153 = scmp.eq.s32.totalorder %s17, 0
    %p154 = por %p152, %p153
    %p155 = scmp.le.s32.totalorder 1, %s11
    %p156 = scmp.lt.s32.totalorder %s11, 3
    %p157 = pnand %p155, %p156
    %p158 = pneg %p157
    // Predicated region
    $region9: #{model_2_forward.1} parent=5 // pred_check
      _
    $region10: #{model_2_forward.1} parent=5 // pred_check_branch
      %160 = sbr.rel (%p157) target = $region12
    $region11: #{model_2_forward.1} parent=5 // pred_region
      %s161 = ssub.s32 %s11, 1
      // Predicated region
      $region13: #{model_2_forward.1} parent=11 // pred_check
        %p162 = pneg %p58
      $region14: #{model_2_forward.1} parent=11 // pred_check_branch
        %164 = sbr.rel (%p162) target = $region16
      $region15: #{model_2_forward.1} parent=11 // pred_region
        _
      $region16: #{model_2_forward.1} parent=11 // pred_fallthru
        _
      // Predicated region
      $region17: #{model_2_forward.1} parent=11 // pred_check
        %p165 = pneg %p79
      $region18: #{model_2_forward.1} parent=11 // pred_check_branch
        %167 = sbr.rel (%p165) target = $region20
      $region19: #{model_2_forward.1} parent=11 // pred_region
        _
      $region20: #{model_2_forward.1} parent=11 // pred_fallthru
        _
      // Predicated region
      $region21: #{model_2_forward.1} parent=11 // pred_check
        %p168 = pneg %p100
      $region22: #{model_2_forward.1} parent=11 // pred_check_branch
        %170 = sbr.rel (%p168) target = $region24
      $region23: #{model_2_forward.1} parent=11 // pred_region
        _
      $region24: #{model_2_forward.1} parent=11 // pred_fallthru
        _
      // Predicated region
      $region25: #{model_2_forward.1} parent=11 // pred_check
        %p171 = pneg %p121
      $region26: #{model_2_forward.1} parent=11 // pred_check_branch
        %173 = sbr.rel (%p171) target = $region28
      $region27: #{model_2_forward.1} parent=11 // pred_region
        _
      $region28: #{model_2_forward.1} parent=11 // pred_fallthru
        _
    $region12: #{model_2_forward.1} parent=5 // pred_fallthru
      _
    %p174 = scmp.lt.s32.totalorder %s11, 2
    // Predicated region
    $region29: #{model_2_forward.1} parent=5 // pred_check
      %p175 = pneg %p174
    $region30: #{model_2_forward.1} parent=5 // pred_check_branch
      %177 = sbr.rel (%p175) target = $region32
    $region31: #{model_2_forward.1} parent=5 // pred_region
      // Predicated region
      $region33: #{model_2_forward.1} parent=31 // pred_check
        %p178 = pneg %p31
      $region34: #{model_2_forward.1} parent=31 // pred_check_branch
        %180 = sbr.rel (%p178) target = $region36
      $region35: #{model_2_forward.1} parent=31 // pred_region
        %s181 = smul.u32 16, %s11
        %p182 = scmp.lt.s32.totalorder %s181, 31
        %s183 = scalar_select %p182, %s181, 31
        %s184 = smul.addr %s183, 7
        %s185 = smul.addr %s184, 4
        %s186 = scalar_lea.vmem %s0, %s185
        %s187 = smul.u32 16, %s11
      $region36: #{model_2_forward.1} parent=31 // pred_fallthru
        _
    $region32: #{model_2_forward.1} parent=5 // pred_fallthru
      _
    %p188 = scmp.le.s32.totalorder 1, %s11
    %p189 = scmp.lt.s32.totalorder %s11, 3
    %p190 = pnand %p188, %p189
    %p191 = pneg %p190
    // Predicated region
    $region37: #{model_2_forward.1} parent=5 // pred_check
      _
    $region38: #{model_2_forward.1} parent=5 // pred_check_branch
      %193 = sbr.rel (%p190) target = $region40
    $region39: #{model_2_forward.1} parent=5 // pred_region
      %s194 = ssub.s32 %s11, 1
      %s195 = smul.u32 16, %s16
      %p196 = scmp.lt.s32.totalorder %s195, 31
      %s197 = scalar_select %p196, %s195, 31
      %s198 = smul.addr %s197, 7
      %s199 = smul.addr %s198, 4
      %s200 = scalar_lea.vmem %s0, %s199
      %p201 = pneg %p37
      %p202 = pneg %p34
      %p203 = pneg %p58
      %p204 = pneg %p55
      %p205 = pneg %p79
      %p206 = pneg %p76
      %p207 = pneg %p100
      %p208 = pneg %p97
      %p209 = pneg %p121
      %p210 = pneg %p118
      %p211 = pneg %p147
      %p212 = pneg %p144
      %s213 = smul.u32 16, %s16
      %p214 = scmp.lt.s32.totalorder %s213, 31
      %s215 = scalar_select %p214, %s213, 31
      %s216 = smul.addr %s215, 8
      %s217 = scalar_lea.vmem %s5, %s216
      %s218 = smul.u32 16, %s16
      %p219 = scmp.lt.s32.totalorder %s218, 31
      %s220 = scalar_select %p219, %s218, 31
      %s221 = smul.addr %s220, 7
      %s222 = smul.addr %s221, 4
      %s223 = scalar_lea.vmem %s0, %s222
      %s224 = smul.u32 16, %s16
      %s225 = smul.u32 16, %s16
      %p226 = scmp.lt.s32.totalorder %s225, 31
      %s227 = scalar_select %p226, %s225, 31
      %s228 = smul.addr %s227, 8
      %s229 = scalar_lea.vmem %s5, %s228
      %s230 = smul.u32 16, %s16
      %v232 = vld [vmem:[%s223] sm:$0xff]
      %v233 = vld [vmem:[%s223 + $0x8] sm:$0xff]
      %v234 = vld [vmem:[%s223 + $0x10] sm:$0xff]
      %v235 = vld [vmem:[%s223 + $0x18] sm:$0xf]
      %v236 = vld [vmem:[%s223 + $0x1c] sm:$0xff]
      %v237 = vld [vmem:[%s223 + $0x24] sm:$0xff]
      %v238 = vld [vmem:[%s223 + $0x2c] sm:$0xff]
      %v239 = vld [vmem:[%s223 + $0x34] sm:$0xf]
      %v240 = vld [vmem:[%s223 + $0x38] sm:$0xff]
      %v241 = vld [vmem:[%s223 + $0x40] sm:$0xff]
      %v242 = vld [vmem:[%s223 + $0x48] sm:$0xff]
      %v243 = vld [vmem:[%s223 + $0x50] sm:$0xf]
      %v244 = vld [vmem:[%s223 + $0x54] sm:$0xff]
      %v245 = vld [vmem:[%s223 + $0x5c] sm:$0xff]
      %v246 = vld [vmem:[%s223 + $0x64] sm:$0xff]
      %v247 = vld [vmem:[%s223 + $0x6c] sm:$0xf]
      %v248 = vld [vmem:[%s223 + $0x70] sm:$0xff]
      %v249 = vld [vmem:[%s223 + $0x78] sm:$0xff]
      %v250 = vld [vmem:[%s223 + $0x80] sm:$0xff]
      %v251 = vld [vmem:[%s223 + $0x88] sm:$0xf]
      %v252 = vld [vmem:[%s223 + $0x8c] sm:$0xff]
      %v253 = vld [vmem:[%s223 + $0x94] sm:$0xff]
      %v254 = vld [vmem:[%s223 + $0x9c] sm:$0xff]
      %v255 = vld [vmem:[%s223 + $0xa4] sm:$0xf]
      %v256 = vld [vmem:[%s223 + $0xa8] sm:$0xff]
      %v257 = vld [vmem:[%s223 + $0xb0] sm:$0xff]
      %v258 = vld [vmem:[%s223 + $0xb8] sm:$0xff]
      %v259 = vld [vmem:[%s223 + $0xc0] sm:$0xf]
      %v260 = vld [vmem:[%s223 + $0xc4] sm:$0xff]
      %v261 = vld [vmem:[%s223 + $0xcc] sm:$0xff]
      %v262 = vld [vmem:[%s223 + $0xd4] sm:$0xff]
      %v263 = vld [vmem:[%s223 + $0xdc] sm:$0xf]
      %v264 = vld [vmem:[%s223 + $0xe0] sm:$0xff]
      %v265 = vld [vmem:[%s223 + $0xe8] sm:$0xff]
      %v266 = vld [vmem:[%s223 + $0xf0] sm:$0xff]
      %v267 = vld [vmem:[%s223 + $0xf8] sm:$0xf]
      %v268 = vld [vmem:[%s223 + $0xfc] sm:$0xff]
      %v269 = vld [vmem:[%s223 + $0x104] sm:$0xff]
      %v270 = vld [vmem:[%s223 + $0x10c] sm:$0xff]
      %v271 = vld [vmem:[%s223 + $0x114] sm:$0xf]
      %v272 = vld [vmem:[%s223 + $0x118] sm:$0xff]
      %v273 = vld [vmem:[%s223 + $0x120] sm:$0xff]
      %v274 = vld [vmem:[%s223 + $0x128] sm:$0xff]
      %v275 = vld [vmem:[%s223 + $0x130] sm:$0xf]
      %v276 = vld [vmem:[%s223 + $0x134] sm:$0xff]
      %v277 = vld [vmem:[%s223 + $0x13c] sm:$0xff]
      %v278 = vld [vmem:[%s223 + $0x144] sm:$0xff]
      %v279 = vld [vmem:[%s223 + $0x14c] sm:$0xf]
      %v280 = vld [vmem:[%s223 + $0x150] sm:$0xff]
      %v281 = vld [vmem:[%s223 + $0x158] sm:$0xff]
      %v282 = vld [vmem:[%s223 + $0x160] sm:$0xff]
      %v283 = vld [vmem:[%s223 + $0x168] sm:$0xf]
      %v284 = vld [vmem:[%s223 + $0x16c] sm:$0xff]
      %v285 = vld [vmem:[%s223 + $0x174] sm:$0xff]
      %v286 = vld [vmem:[%s223 + $0x17c] sm:$0xff]
      %v287 = vld [vmem:[%s223 + $0x184] sm:$0xf]
      %v288 = vld [vmem:[%s223 + $0x188] sm:$0xff]
      %v289 = vld [vmem:[%s223 + $0x190] sm:$0xff]
      %v290 = vld [vmem:[%s223 + $0x198] sm:$0xff]
      %v291 = vld [vmem:[%s223 + $0x1a0] sm:$0xf]
      %v292 = vld [vmem:[%s223 + $0x1a4] sm:$0xff]
      %v293 = vld [vmem:[%s223 + $0x1ac] sm:$0xff]
      %v294 = vld [vmem:[%s223 + $0x1b4] sm:$0xff]
      %v295 = vld [vmem:[%s223 + $0x1bc] sm:$0xf]
      %v296 = vld [vmem:[%s1] sm:$0xf]
      %v297 = vld [vmem:[%s1 + $0x4] sm:$0xf]
      %v298 = vld [vmem:[%s1 + $0x8] sm:$0xf]
      %v299 = vld [vmem:[%s1 + $0xc] sm:$0xf]
      %v300 = vld [vmem:[%s1 + $0x10] sm:$0xf]
      %v301 = vld [vmem:[%s1 + $0x14] sm:$0xf]
      %v302 = vld [vmem:[%s1 + $0x18] sm:$0xf]
      %v303 = vld [vmem:[%s1 + $0x1c] sm:$0xf]
      %v304 = vld [vmem:[%s1 + $0x20] sm:$0xf]
      %v305 = vld [vmem:[%s1 + $0x24] sm:$0xf]
      %v306 = vld [vmem:[%s1 + $0x28] sm:$0xf]
      %v307 = vld [vmem:[%s1 + $0x2c] sm:$0xf]
      %v308 = vld [vmem:[%s1 + $0x30] sm:$0xf]
      %v309 = vld [vmem:[%s1 + $0x34] sm:$0xf]
      %v310 = vld [vmem:[%s1 + $0x38] sm:$0xf]
      %v311 = vld [vmem:[%s1 + $0x3c] sm:$0xf]
      %v312 = vld [vmem:[%s1 + $0x40] sm:$0xf]
      %v313 = vld [vmem:[%s1 + $0x44] sm:$0xf]
      %v314 = vld [vmem:[%s1 + $0x48] sm:$0xf]
      %v315 = vld [vmem:[%s1 + $0x4c] sm:$0xf]
      %v316 = vld [vmem:[%s1 + $0x50] sm:$0xf]
      %v317 = vld [vmem:[%s1 + $0x54] sm:$0xf]
      %v318 = vld [vmem:[%s1 + $0x58] sm:$0xf]
      %v319 = vld [vmem:[%s1 + $0x5c] sm:$0xf]
      %v320 = vld [vmem:[%s1 + $0x60] sm:$0xf]
      %v321 = vld [vmem:[%s1 + $0x64] sm:$0xf]
      %v322 = vld [vmem:[%s1 + $0x68] sm:$0xf]
      %v323 = vld [vmem:[%s1 + $0x6c] sm:$0xf]
      %v324 = vld [vmem:[%s1 + $0x70] sm:$0xf]
      %v325 = vld [vmem:[%s1 + $0x74] sm:$0xf]
      %v326 = vld [vmem:[%s1 + $0x78] sm:$0xf]
      %v327 = vld [vmem:[%s1 + $0x7c] sm:$0xf]
      %v328 = vld [vmem:[%s1 + $0x80] sm:$0xf]
      %v329 = vld [vmem:[%s1 + $0x84] sm:$0xf]
      %v330 = vld [vmem:[%s1 + $0x88] sm:$0xf]
      %v331 = vld [vmem:[%s1 + $0x8c] sm:$0xf]
      %v332 = vld [vmem:[%s1 + $0x90] sm:$0xf]
      %v333 = vld [vmem:[%s1 + $0x94] sm:$0xf]
      %v334 = vld [vmem:[%s1 + $0x98] sm:$0xf]
      %v335 = vld [vmem:[%s1 + $0x9c] sm:$0xf]
      %v336 = vld [vmem:[%s1 + $0xa0] sm:$0xf]
      %v337 = vld [vmem:[%s1 + $0xa4] sm:$0xf]
      %v338 = vld [vmem:[%s1 + $0xa8] sm:$0xf]
      %v339 = vld [vmem:[%s1 + $0xac] sm:$0xf]
      %v340 = vld [vmem:[%s1 + $0xb0] sm:$0xf]
      %v341 = vld [vmem:[%s1 + $0xb4] sm:$0xf]
      %v342 = vld [vmem:[%s1 + $0xb8] sm:$0xf]
      %v343 = vld [vmem:[%s1 + $0xbc] sm:$0xf]
      %v344 = vld [vmem:[%s1 + $0xc0] sm:$0xf]
      %v345 = vld [vmem:[%s1 + $0xc4] sm:$0xf]
      %v346 = vld [vmem:[%s1 + $0xc8] sm:$0xf]
      %v347 = vld [vmem:[%s1 + $0xcc] sm:$0xf]
      %v348 = vld [vmem:[%s1 + $0xd0] sm:$0xf]
      %v349 = vld [vmem:[%s1 + $0xd4] sm:$0xf]
      %v350 = vld [vmem:[%s1 + $0xd8] sm:$0xf]
      %v351 = vld [vmem:[%s1 + $0xdc] sm:$0xf]
      %v352 = vld [vmem:[%s1 + $0xe0] sm:$0xf]
      %v353 = vld [vmem:[%s1 + $0xe4] sm:$0xf]
      %v354 = vld [vmem:[%s1 + $0xe8] sm:$0xf]
      %v355 = vld [vmem:[%s1 + $0xec] sm:$0xf]
      %v356 = vld [vmem:[%s1 + $0xf0] sm:$0xf]
      %v357 = vld [vmem:[%s1 + $0xf4] sm:$0xf]
      %v358 = vld [vmem:[%s1 + $0xf8] sm:$0xf]
      %v359 = vld [vmem:[%s1 + $0xfc] sm:$0xf]
      %v360 = vld [vmem:[%s1 + $0x100] sm:$0xf]
      %v361 = vld [vmem:[%s1 + $0x104] sm:$0xf]
      %v362 = vld [vmem:[%s1 + $0x108] sm:$0xf]
      %v363 = vld [vmem:[%s1 + $0x10c] sm:$0xf]
      %v364 = vld [vmem:[%s1 + $0x110] sm:$0xf]
      %v365 = vld [vmem:[%s1 + $0x114] sm:$0xf]
      %v366 = vld [vmem:[%s1 + $0x118] sm:$0xf]
      %v367 = vld [vmem:[%s1 + $0x11c] sm:$0xf]
      %v368 = vld [vmem:[%s1 + $0x120] sm:$0xf]
      %v369 = vld [vmem:[%s1 + $0x124] sm:$0xf]
      %v370 = vld [vmem:[%s1 + $0x128] sm:$0xf]
      %v371 = vld [vmem:[%s1 + $0x12c] sm:$0xf]
      %v372 = vld [vmem:[%s1 + $0x130] sm:$0xf]
      %v373 = vld [vmem:[%s1 + $0x134] sm:$0xf]
      %v374 = vld [vmem:[%s1 + $0x138] sm:$0xf]
      %v375 = vld [vmem:[%s1 + $0x13c] sm:$0xf]
      %v376 = vld [vmem:[%s1 + $0x140] sm:$0xf]
      %v377 = vld [vmem:[%s1 + $0x144] sm:$0xf]
      %v378 = vld [vmem:[%s1 + $0x148] sm:$0xf]
      %v379 = vld [vmem:[%s1 + $0x14c] sm:$0xf]
      %v380 = vld [vmem:[%s1 + $0x150] sm:$0xf]
      %v381 = vld [vmem:[%s1 + $0x154] sm:$0xf]
      %v382 = vld [vmem:[%s1 + $0x158] sm:$0xf]
      %v383 = vld [vmem:[%s1 + $0x15c] sm:$0xf]
      %v384 = vld [vmem:[%s1 + $0x160] sm:$0xf]
      %v385 = vld [vmem:[%s1 + $0x164] sm:$0xf]
      %v386 = vld [vmem:[%s1 + $0x168] sm:$0xf]
      %v387 = vld [vmem:[%s1 + $0x16c] sm:$0xf]
      %v388 = vld [vmem:[%s1 + $0x170] sm:$0xf]
      %v389 = vld [vmem:[%s1 + $0x174] sm:$0xf]
      %v390 = vld [vmem:[%s1 + $0x178] sm:$0xf]
      %v391 = vld [vmem:[%s1 + $0x17c] sm:$0xf]
      %v392 = vld [vmem:[%s1 + $0x180] sm:$0xf]
      %v393 = vld [vmem:[%s1 + $0x184] sm:$0xf]
      %v394 = vld [vmem:[%s2] sm:$0x1]
      %v396 = vlaneseq
      %v397 = vshrl.u32 %v396, 7
      %v398 = vsub.s32 0, %v397
      %v399 = vrot.slane %v394, %v398
      %v465 = vunpack.c.l.b16 %v232
      %v466 = vunpack.c.h.b16 %v232
      %v467 = vunpack.c.l.b16 %v233
      %v468 = vunpack.c.h.b16 %v233
      %v469 = vunpack.c.l.b16 %v234
      %v470 = vunpack.c.h.b16 %v234
      %v471 = vunpack.c.l.b16 %v235
      %v472 = vunpack.c.l.b16 %v236
      %v473 = vunpack.c.h.b16 %v236
      %v474 = vunpack.c.l.b16 %v237
      %v475 = vunpack.c.h.b16 %v237
      %v476 = vunpack.c.l.b16 %v238
      %v477 = vunpack.c.h.b16 %v238
      %v478 = vunpack.c.l.b16 %v239
      %v479 = vunpack.c.l.b16 %v240
      %v480 = vunpack.c.h.b16 %v240
      %v481 = vunpack.c.l.b16 %v241
      %v482 = vunpack.c.h.b16 %v241
      %v483 = vunpack.c.l.b16 %v242
      %v484 = vunpack.c.h.b16 %v242
      %v485 = vunpack.c.l.b16 %v243
      %v486 = vunpack.c.l.b16 %v244
      %v487 = vunpack.c.h.b16 %v244
      %v488 = vunpack.c.l.b16 %v245
      %v489 = vunpack.c.h.b16 %v245
      %v490 = vunpack.c.l.b16 %v246
      %v491 = vunpack.c.h.b16 %v246
      %v492 = vunpack.c.l.b16 %v247
      %v493 = vunpack.c.l.b16 %v248
      %v494 = vunpack.c.h.b16 %v248
      %v495 = vunpack.c.l.b16 %v249
      %v496 = vunpack.c.h.b16 %v249
      %v497 = vunpack.c.l.b16 %v250
      %v498 = vunpack.c.h.b16 %v250
      %v499 = vunpack.c.l.b16 %v251
      %v500 = vunpack.c.l.b16 %v252
      %v501 = vunpack.c.h.b16 %v252
      %v502 = vunpack.c.l.b16 %v253
      %v503 = vunpack.c.h.b16 %v253
      %v504 = vunpack.c.l.b16 %v254
      %v505 = vunpack.c.h.b16 %v254
      %v506 = vunpack.c.l.b16 %v255
      %v507 = vunpack.c.l.b16 %v256
      %v508 = vunpack.c.h.b16 %v256
      %v509 = vunpack.c.l.b16 %v257
      %v510 = vunpack.c.h.b16 %v257
      %v511 = vunpack.c.l.b16 %v258
      %v512 = vunpack.c.h.b16 %v258
      %v513 = vunpack.c.l.b16 %v259
      %v514 = vunpack.c.l.b16 %v260
      %v515 = vunpack.c.h.b16 %v260
      %v516 = vunpack.c.l.b16 %v261
      %v517 = vunpack.c.h.b16 %v261
      %v518 = vunpack.c.l.b16 %v262
      %v519 = vunpack.c.h.b16 %v262
      %v520 = vunpack.c.l.b16 %v263
      %v521 = vunpack.c.l.b16 %v264
      %v522 = vunpack.c.h.b16 %v264
      %v523 = vunpack.c.l.b16 %v265
      %v524 = vunpack.c.h.b16 %v265
      %v525 = vunpack.c.l.b16 %v266
      %v526 = vunpack.c.h.b16 %v266
      %v527 = vunpack.c.l.b16 %v267
      %v528 = vunpack.c.l.b16 %v268
      %v529 = vunpack.c.h.b16 %v268
      %v530 = vunpack.c.l.b16 %v269
      %v531 = vunpack.c.h.b16 %v269
      %v532 = vunpack.c.l.b16 %v270
      %v533 = vunpack.c.h.b16 %v270
      %v534 = vunpack.c.l.b16 %v271
      %v535 = vunpack.c.l.b16 %v272
      %v536 = vunpack.c.h.b16 %v272
      %v537 = vunpack.c.l.b16 %v273
      %v538 = vunpack.c.h.b16 %v273
      %v539 = vunpack.c.l.b16 %v274
      %v540 = vunpack.c.h.b16 %v274
      %v541 = vunpack.c.l.b16 %v275
      %v542 = vunpack.c.l.b16 %v276
      %v543 = vunpack.c.h.b16 %v276
      %v544 = vunpack.c.l.b16 %v277
      %v545 = vunpack.c.h.b16 %v277
      %v546 = vunpack.c.l.b16 %v278
      %v547 = vunpack.c.h.b16 %v278
      %v548 = vunpack.c.l.b16 %v279
      %v549 = vunpack.c.l.b16 %v280
      %v550 = vunpack.c.h.b16 %v280
      %v551 = vunpack.c.l.b16 %v281
      %v552 = vunpack.c.h.b16 %v281
      %v553 = vunpack.c.l.b16 %v282
      %v554 = vunpack.c.h.b16 %v282
      %v555 = vunpack.c.l.b16 %v283
      %v556 = vunpack.c.l.b16 %v284
      %v557 = vunpack.c.h.b16 %v284
      %v558 = vunpack.c.l.b16 %v285
      %v559 = vunpack.c.h.b16 %v285
      %v560 = vunpack.c.l.b16 %v286
      %v561 = vunpack.c.h.b16 %v286
      %v562 = vunpack.c.l.b16 %v287
      %v563 = vunpack.c.l.b16 %v288
      %v564 = vunpack.c.h.b16 %v288
      %v565 = vunpack.c.l.b16 %v289
      %v566 = vunpack.c.h.b16 %v289
      %v567 = vunpack.c.l.b16 %v290
      %v568 = vunpack.c.h.b16 %v290
      %v569 = vunpack.c.l.b16 %v291
      %v570 = vunpack.c.l.b16 %v292
      %v571 = vunpack.c.h.b16 %v292
      %v572 = vunpack.c.l.b16 %v293
      %v573 = vunpack.c.h.b16 %v293
      %v574 = vunpack.c.l.b16 %v294
      %v575 = vunpack.c.h.b16 %v294
      %v576 = vunpack.c.l.b16 %v295
      %v577 = vpack.c.b16 %v472, %v465
      %v578 = vpack.c.b16 %v473, %v466
      %v579 = vpack.c.b16 %v474, %v467
      %v580 = vpack.c.b16 %v475, %v468
      %v581 = vpack.c.b16 %v476, %v469
      %v582 = vpack.c.b16 %v477, %v470
      %v583 = vpack.c.b16 %v478, %v471
      %v584 = vpack.c.b16 %v486, %v479
      %v585 = vpack.c.b16 %v487, %v480
      %v586 = vpack.c.b16 %v488, %v481
      %v587 = vpack.c.b16 %v489, %v482
      %v588 = vpack.c.b16 %v490, %v483
      %v589 = vpack.c.b16 %v491, %v484
      %v590 = vpack.c.b16 %v492, %v485
      %v591 = vpack.c.b16 %v500, %v493
      %v592 = vpack.c.b16 %v501, %v494
      %v593 = vpack.c.b16 %v502, %v495
      %v594 = vpack.c.b16 %v503, %v496
      %v595 = vpack.c.b16 %v504, %v497
      %v596 = vpack.c.b16 %v505, %v498
      %v597 = vpack.c.b16 %v506, %v499
      %v598 = vpack.c.b16 %v514, %v507
      %v599 = vpack.c.b16 %v515, %v508
      %v600 = vpack.c.b16 %v516, %v509
      %v601 = vpack.c.b16 %v517, %v510
      %v602 = vpack.c.b16 %v518, %v511
      %v603 = vpack.c.b16 %v519, %v512
      %v604 = vpack.c.b16 %v520, %v513
      %v605 = vpack.c.b16 %v528, %v521
      %v606 = vpack.c.b16 %v529, %v522
      %v607 = vpack.c.b16 %v530, %v523
      %v608 = vpack.c.b16 %v531, %v524
      %v609 = vpack.c.b16 %v532, %v525
      %v610 = vpack.c.b16 %v533, %v526
      %v611 = vpack.c.b16 %v534, %v527
      %v612 = vpack.c.b16 %v542, %v535
      %v613 = vpack.c.b16 %v543, %v536
      %v614 = vpack.c.b16 %v544, %v537
      %v615 = vpack.c.b16 %v545, %v538
      %v616 = vpack.c.b16 %v546, %v539
      %v617 = vpack.c.b16 %v547, %v540
      %v618 = vpack.c.b16 %v548, %v541
      %v619 = vpack.c.b16 %v556, %v549
      %v620 = vpack.c.b16 %v557, %v550
      %v621 = vpack.c.b16 %v558, %v551
      %v622 = vpack.c.b16 %v559, %v552
      %v623 = vpack.c.b16 %v560, %v553
      %v624 = vpack.c.b16 %v561, %v554
      %v625 = vpack.c.b16 %v562, %v555
      %v626 = vpack.c.b16 %v570, %v563
      %v627 = vpack.c.b16 %v571, %v564
      %v628 = vpack.c.b16 %v572, %v565
      %v629 = vpack.c.b16 %v573, %v566
      %v630 = vpack.c.b16 %v574, %v567
      %v631 = vpack.c.b16 %v575, %v568
      %v632 = vpack.c.b16 %v576, %v569
      %v779 = vunpack.c.l.b16 %v296
      %v780 = vunpack.c.l.b16 %v297
      %v781 = vunpack.c.l.b16 %v298
      %v782 = vunpack.c.l.b16 %v299
      %v783 = vunpack.c.l.b16 %v300
      %v784 = vunpack.c.l.b16 %v301
      %v785 = vunpack.c.l.b16 %v302
      %v786 = vunpack.c.l.b16 %v303
      %v787 = vunpack.c.l.b16 %v304
      %v788 = vunpack.c.l.b16 %v305
      %v789 = vunpack.c.l.b16 %v306
      %v790 = vunpack.c.l.b16 %v307
      %v791 = vunpack.c.l.b16 %v308
      %v792 = vunpack.c.l.b16 %v309
      %v793 = vunpack.c.l.b16 %v310
      %v794 = vunpack.c.l.b16 %v311
      %v795 = vunpack.c.l.b16 %v312
      %v796 = vunpack.c.l.b16 %v313
      %v797 = vunpack.c.l.b16 %v314
      %v798 = vunpack.c.l.b16 %v315
      %v799 = vunpack.c.l.b16 %v316
      %v800 = vunpack.c.l.b16 %v317
      %v801 = vunpack.c.l.b16 %v318
      %v802 = vunpack.c.l.b16 %v319
      %v803 = vunpack.c.l.b16 %v320
      %v804 = vunpack.c.l.b16 %v321
      %v805 = vunpack.c.l.b16 %v322
      %v806 = vunpack.c.l.b16 %v323
      %v807 = vunpack.c.l.b16 %v324
      %v808 = vunpack.c.l.b16 %v325
      %v809 = vunpack.c.l.b16 %v326
      %v810 = vunpack.c.l.b16 %v327
      %v811 = vunpack.c.l.b16 %v328
      %v812 = vunpack.c.l.b16 %v329
      %v813 = vunpack.c.l.b16 %v330
      %v814 = vunpack.c.l.b16 %v331
      %v815 = vunpack.c.l.b16 %v332
      %v816 = vunpack.c.l.b16 %v333
      %v817 = vunpack.c.l.b16 %v334
      %v818 = vunpack.c.l.b16 %v335
      %v819 = vunpack.c.l.b16 %v336
      %v820 = vunpack.c.l.b16 %v337
      %v821 = vunpack.c.l.b16 %v338
      %v822 = vunpack.c.l.b16 %v339
      %v823 = vunpack.c.l.b16 %v340
      %v824 = vunpack.c.l.b16 %v341
      %v825 = vunpack.c.l.b16 %v342
      %v826 = vunpack.c.l.b16 %v343
      %v827 = vunpack.c.l.b16 %v344
      %v828 = vunpack.c.l.b16 %v345
      %v829 = vunpack.c.l.b16 %v346
      %v830 = vunpack.c.l.b16 %v347
      %v831 = vunpack.c.l.b16 %v348
      %v832 = vunpack.c.l.b16 %v349
      %v833 = vunpack.c.l.b16 %v350
      %v834 = vunpack.c.l.b16 %v351
      %v835 = vunpack.c.l.b16 %v352
      %v836 = vunpack.c.l.b16 %v353
      %v837 = vunpack.c.l.b16 %v354
      %v838 = vunpack.c.l.b16 %v355
      %v839 = vunpack.c.l.b16 %v356
      %v840 = vunpack.c.l.b16 %v357
      %v841 = vunpack.c.l.b16 %v358
      %v842 = vunpack.c.l.b16 %v359
      %v843 = vunpack.c.l.b16 %v360
      %v844 = vunpack.c.l.b16 %v361
      %v845 = vunpack.c.l.b16 %v362
      %v846 = vunpack.c.l.b16 %v363
      %v847 = vunpack.c.l.b16 %v364
      %v848 = vunpack.c.l.b16 %v365
      %v849 = vunpack.c.l.b16 %v366
      %v850 = vunpack.c.l.b16 %v367
      %v851 = vunpack.c.l.b16 %v368
      %v852 = vunpack.c.l.b16 %v369
      %v853 = vunpack.c.l.b16 %v370
      %v854 = vunpack.c.l.b16 %v371
      %v855 = vunpack.c.l.b16 %v372
      %v856 = vunpack.c.l.b16 %v373
      %v857 = vunpack.c.l.b16 %v374
      %v858 = vunpack.c.l.b16 %v375
      %v859 = vunpack.c.l.b16 %v376
      %v860 = vunpack.c.l.b16 %v377
      %v861 = vunpack.c.l.b16 %v378
      %v862 = vunpack.c.l.b16 %v379
      %v863 = vunpack.c.l.b16 %v380
      %v864 = vunpack.c.l.b16 %v381
      %v865 = vunpack.c.l.b16 %v382
      %v866 = vunpack.c.l.b16 %v383
      %v867 = vunpack.c.l.b16 %v384
      %v868 = vunpack.c.l.b16 %v385
      %v869 = vunpack.c.l.b16 %v386
      %v870 = vunpack.c.l.b16 %v387
      %v871 = vunpack.c.l.b16 %v388
      %v872 = vunpack.c.l.b16 %v389
      %v873 = vunpack.c.l.b16 %v390
      %v874 = vunpack.c.l.b16 %v391
      %v875 = vunpack.c.l.b16 %v392
      %v876 = vunpack.c.l.b16 %v393
      %v877 = vpack.c.b16 %v780, %v779
      %v878 = vpack.c.b16 %v782, %v781
      %v879 = vpack.c.b16 %v784, %v783
      %v880 = vpack.c.b16 %v786, %v785
      %v881 = vpack.c.b16 %v788, %v787
      %v882 = vpack.c.b16 %v790, %v789
      %v883 = vpack.c.b16 %v792, %v791
      %v884 = vpack.c.b16 %v794, %v793
      %v885 = vpack.c.b16 %v796, %v795
      %v886 = vpack.c.b16 %v798, %v797
      %v887 = vpack.c.b16 %v800, %v799
      %v888 = vpack.c.b16 %v802, %v801
      %v889 = vpack.c.b16 %v804, %v803
      %v890 = vpack.c.b16 %v806, %v805
      %v891 = vpack.c.b16 %v808, %v807
      %v892 = vpack.c.b16 %v810, %v809
      %v893 = vpack.c.b16 %v812, %v811
      %v894 = vpack.c.b16 %v814, %v813
      %v895 = vpack.c.b16 %v816, %v815
      %v896 = vpack.c.b16 %v818, %v817
      %v897 = vpack.c.b16 %v820, %v819
      %v898 = vpack.c.b16 %v822, %v821
      %v899 = vpack.c.b16 %v824, %v823
      %v900 = vpack.c.b16 %v826, %v825
      %v901 = vpack.c.b16 %v828, %v827
      %v902 = vpack.c.b16 %v830, %v829
      %v903 = vpack.c.b16 %v832, %v831
      %v904 = vpack.c.b16 %v834, %v833
      %v905 = vpack.c.b16 %v836, %v835
      %v906 = vpack.c.b16 %v838, %v837
      %v907 = vpack.c.b16 %v840, %v839
      %v908 = vpack.c.b16 %v842, %v841
      %v909 = vpack.c.b16 %v844, %v843
      %v910 = vpack.c.b16 %v846, %v845
      %v911 = vpack.c.b16 %v848, %v847
      %v912 = vpack.c.b16 %v850, %v849
      %v913 = vpack.c.b16 %v852, %v851
      %v914 = vpack.c.b16 %v854, %v853
      %v915 = vpack.c.b16 %v856, %v855
      %v916 = vpack.c.b16 %v858, %v857
      %v917 = vpack.c.b16 %v860, %v859
      %v918 = vpack.c.b16 %v862, %v861
      %v919 = vpack.c.b16 %v864, %v863
      %v920 = vpack.c.b16 %v866, %v865
      %v921 = vpack.c.b16 %v868, %v867
      %v922 = vpack.c.b16 %v870, %v869
      %v923 = vpack.c.b16 %v872, %v871
      %v924 = vpack.c.b16 %v874, %v873
      %v925 = vpack.c.b16 %v876, %v875
      %vm975 = vcmask 130048
      %v977 = vsel %vm975, %v583, 0
      %v980 = vsel %vm975, %v590, 0
      %v983 = vsel %vm975, %v597, 0
      %v986 = vsel %vm975, %v604, 0
      %v989 = vsel %vm975, %v611, 0
      %v992 = vsel %vm975, %v618, 0
      %v995 = vsel %vm975, %v625, 0
      %v998 = vsel %vm975, %v632, 0
      %1000 = vmatprep.subr.bf16.mxu0 0
      %1001 = vmatpush1.bf16.msra.mxu0 %v884
      %1002 = vmatprep.subr.bf16.mxu0 0
      %1003 = vmatpush1.bf16.msra.mxu0 %v883
      %1004 = vmatprep.subr.bf16.mxu0 0
      %1005 = vmatpush1.bf16.msra.mxu0 %v882
      %1006 = vmatprep.subr.bf16.mxu0 0
      %1007 = vmatpush1.bf16.msra.mxu0 %v881
      %1008 = vmatprep.subr.bf16.mxu0 0
      %1009 = vmatpush1.bf16.msra.mxu0 %v880
      %1010 = vmatprep.subr.bf16.mxu0 0
      %1011 = vmatpush1.bf16.msra.mxu0 %v879
      %1012 = vmatprep.subr.bf16.mxu0 0
      %1013 = vmatpush1.bf16.msra.mxu0 %v878
      %1014 = vmatprep.subr.bf16.mxu0 0
      %1015 = vmatpush1.bf16.msra.mxu0 %v877
      %1016 = vmatprep.subr.bf16.mxu0 0
      %1017 = vmatpush2.bf16.msra.mxu0 %v892
      %1018 = vmatprep.subr.bf16.mxu0 0
      %1019 = vmatpush2.bf16.msra.mxu0 %v891
      %1020 = vmatprep.subr.bf16.mxu0 0
      %1021 = vmatpush2.bf16.msra.mxu0 %v890
      %1022 = vmatprep.subr.bf16.mxu0 0
      %1023 = vmatpush2.bf16.msra.mxu0 %v889
      %1024 = vmatprep.subr.bf16.mxu0 0
      %1025 = vmatpush2.bf16.msra.mxu0 %v888
      %1026 = vmatprep.subr.bf16.mxu0 0
      %1027 = vmatpush2.bf16.msra.mxu0 %v887
      %1028 = vmatprep.subr.bf16.mxu0 0
      %1029 = vmatpush2.bf16.msra.mxu0 %v886
      %1030 = vmatprep.subr.bf16.mxu0 0
      %1031 = vmatpush2.bf16.msra.mxu0 %v885
      %1032 = vmatprep.mubr.bf16.mxu0 %v578
      %1033 = vmatmul.mubr.bf16.gmra.mxu0 %v577
      %v1034 = vpop.f32.mrf.mxu0
      %v1035 = vadd.f32 %v399, %v1034
      %v1036 = vpop.f32.mrf.mxu0
      %v1037 = vpop.f32.mrf.mxu0
      %v1038 = vadd.f32 %v399, %v1037
      %v1039 = vpop.f32.mrf.mxu0
      %1040 = vmatprep.mubr.bf16.mxu0 %v585
      %1041 = vmatmul.mubr.bf16.gmra.mxu0 %v584
      %v1042 = vpop.f32.mrf.mxu0
      %v1043 = vadd.f32 %v399, %v1042
      %v1044 = vpop.f32.mrf.mxu0
      %v1045 = vpop.f32.mrf.mxu0
      %v1046 = vadd.f32 %v399, %v1045
      %v1047 = vpop.f32.mrf.mxu0
      %1048 = vmatprep.mubr.bf16.mxu0 %v592
      %1049 = vmatmul.mubr.bf16.gmra.mxu0 %v591
      %v1050 = vpop.f32.mrf.mxu0
      %v1051 = vadd.f32 %v399, %v1050
      %v1052 = vpop.f32.mrf.mxu0
      %v1053 = vpop.f32.mrf.mxu0
      %v1054 = vadd.f32 %v399, %v1053
      %v1055 = vpop.f32.mrf.mxu0
      %1056 = vmatprep.mubr.bf16.mxu0 %v599
      %1057 = vmatmul.mubr.bf16.gmra.mxu0 %v598
      %v1058 = vpop.f32.mrf.mxu0
      %v1059 = vadd.f32 %v399, %v1058
      %v1060 = vpop.f32.mrf.mxu0
      %v1061 = vpop.f32.mrf.mxu0
      %v1062 = vadd.f32 %v399, %v1061
      %v1063 = vpop.f32.mrf.mxu0
      %1064 = vmatprep.mubr.bf16.mxu0 %v606
      %1065 = vmatmul.mubr.bf16.gmra.mxu0 %v605
      %v1066 = vpop.f32.mrf.mxu0
      %v1067 = vadd.f32 %v399, %v1066
      %v1068 = vpop.f32.mrf.mxu0
      %v1069 = vpop.f32.mrf.mxu0
      %v1070 = vadd.f32 %v399, %v1069
      %v1071 = vpop.f32.mrf.mxu0
      %1072 = vmatprep.mubr.bf16.mxu0 %v613
      %1073 = vmatmul.mubr.bf16.gmra.mxu0 %v612
      %v1074 = vpop.f32.mrf.mxu0
      %v1075 = vadd.f32 %v399, %v1074
      %v1076 = vpop.f32.mrf.mxu0
      %v1077 = vpop.f32.mrf.mxu0
      %v1078 = vadd.f32 %v399, %v1077
      %v1079 = vpop.f32.mrf.mxu0
      %1080 = vmatprep.mubr.bf16.mxu0 %v620
      %1081 = vmatmul.mubr.bf16.gmra.mxu0 %v619
      %v1082 = vpop.f32.mrf.mxu0
      %v1083 = vadd.f32 %v399, %v1082
      %v1084 = vpop.f32.mrf.mxu0
      %v1085 = vpop.f32.mrf.mxu0
      %v1086 = vadd.f32 %v399, %v1085
      %v1087 = vpop.f32.mrf.mxu0
      %1088 = vmatprep.mubr.bf16.mxu0 %v627
      %1089 = vmatmul.mubr.bf16.gmra.mxu0 %v626
      %v1090 = vpop.f32.mrf.mxu0
      %v1091 = vadd.f32 %v399, %v1090
      %v1092 = vpop.f32.mrf.mxu0
      %v1093 = vpop.f32.mrf.mxu0
      %v1094 = vadd.f32 %v399, %v1093
      %v1095 = vpop.f32.mrf.mxu0
      %1096 = vdwg.mxu0
      %1097 = vmatprep.subr.bf16.mxu0 0
      %1098 = vmatpush1.bf16.msra.mxu0 %v900
      %1099 = vmatprep.subr.bf16.mxu0 0
      %1100 = vmatpush1.bf16.msra.mxu0 %v899
      %1101 = vmatprep.subr.bf16.mxu0 0
      %1102 = vmatpush1.bf16.msra.mxu0 %v898
      %1103 = vmatprep.subr.bf16.mxu0 0
      %1104 = vmatpush1.bf16.msra.mxu0 %v897
      %1105 = vmatprep.subr.bf16.mxu0 0
      %1106 = vmatpush1.bf16.msra.mxu0 %v896
      %1107 = vmatprep.subr.bf16.mxu0 0
      %1108 = vmatpush1.bf16.msra.mxu0 %v895
      %1109 = vmatprep.subr.bf16.mxu0 0
      %1110 = vmatpush1.bf16.msra.mxu0 %v894
      %1111 = vmatprep.subr.bf16.mxu0 0
      %1112 = vmatpush1.bf16.msra.mxu0 %v893
      %1113 = vmatprep.subr.bf16.mxu0 0
      %1114 = vmatpush2.bf16.msra.mxu0 %v908
      %1115 = vmatprep.subr.bf16.mxu0 0
      %1116 = vmatpush2.bf16.msra.mxu0 %v907
      %1117 = vmatprep.subr.bf16.mxu0 0
      %1118 = vmatpush2.bf16.msra.mxu0 %v906
      %1119 = vmatprep.subr.bf16.mxu0 0
      %1120 = vmatpush2.bf16.msra.mxu0 %v905
      %1121 = vmatprep.subr.bf16.mxu0 0
      %1122 = vmatpush2.bf16.msra.mxu0 %v904
      %1123 = vmatprep.subr.bf16.mxu0 0
      %1124 = vmatpush2.bf16.msra.mxu0 %v903
      %1125 = vmatprep.subr.bf16.mxu0 0
      %1126 = vmatpush2.bf16.msra.mxu0 %v902
      %1127 = vmatprep.subr.bf16.mxu0 0
      %1128 = vmatpush2.bf16.msra.mxu0 %v901
      %1129 = vmatprep.mubr.bf16.mxu0 %v580
      %1130 = vmatmul.mubr.bf16.gmra.mxu0 %v579
      %v1131 = vpop.f32.mrf.mxu0
      %v1132 = vadd.f32 %v1035, %v1131
      %v1133 = vpop.f32.mrf.mxu0
      %v1134 = vpop.f32.mrf.mxu0
      %v1135 = vadd.f32 %v1038, %v1134
      %v1136 = vpop.f32.mrf.mxu0
      %1137 = vmatprep.mubr.bf16.mxu0 %v587
      %1138 = vmatmul.mubr.bf16.gmra.mxu0 %v586
      %v1139 = vpop.f32.mrf.mxu0
      %v1140 = vadd.f32 %v1043, %v1139
      %v1141 = vpop.f32.mrf.mxu0
      %v1142 = vpop.f32.mrf.mxu0
      %v1143 = vadd.f32 %v1046, %v1142
      %v1144 = vpop.f32.mrf.mxu0
      %1145 = vmatprep.mubr.bf16.mxu0 %v594
      %1146 = vmatmul.mubr.bf16.gmra.mxu0 %v593
      %v1147 = vpop.f32.mrf.mxu0
      %v1148 = vadd.f32 %v1051, %v1147
      %v1149 = vpop.f32.mrf.mxu0
      %v1150 = vpop.f32.mrf.mxu0
      %v1151 = vadd.f32 %v1054, %v1150
      %v1152 = vpop.f32.mrf.mxu0
      %1153 = vmatprep.mubr.bf16.mxu0 %v601
      %1154 = vmatmul.mubr.bf16.gmra.mxu0 %v600
      %v1155 = vpop.f32.mrf.mxu0
      %v1156 = vadd.f32 %v1059, %v1155
      %v1157 = vpop.f32.mrf.mxu0
      %v1158 = vpop.f32.mrf.mxu0
      %v1159 = vadd.f32 %v1062, %v1158
      %v1160 = vpop.f32.mrf.mxu0
      %1161 = vmatprep.mubr.bf16.mxu0 %v608
      %1162 = vmatmul.mubr.bf16.gmra.mxu0 %v607
      %v1163 = vpop.f32.mrf.mxu0
      %v1164 = vadd.f32 %v1067, %v1163
      %v1165 = vpop.f32.mrf.mxu0
      %v1166 = vpop.f32.mrf.mxu0
      %v1167 = vadd.f32 %v1070, %v1166
      %v1168 = vpop.f32.mrf.mxu0
      %1169 = vmatprep.mubr.bf16.mxu0 %v615
      %1170 = vmatmul.mubr.bf16.gmra.mxu0 %v614
      %v1171 = vpop.f32.mrf.mxu0
      %v1172 = vadd.f32 %v1075, %v1171
      %v1173 = vpop.f32.mrf.mxu0
      %v1174 = vpop.f32.mrf.mxu0
      %v1175 = vadd.f32 %v1078, %v1174
      %v1176 = vpop.f32.mrf.mxu0
      %1177 = vmatprep.mubr.bf16.mxu0 %v622
      %1178 = vmatmul.mubr.bf16.gmra.mxu0 %v621
      %v1179 = vpop.f32.mrf.mxu0
      %v1180 = vadd.f32 %v1083, %v1179
      %v1181 = vpop.f32.mrf.mxu0
      %v1182 = vpop.f32.mrf.mxu0
      %v1183 = vadd.f32 %v1086, %v1182
      %v1184 = vpop.f32.mrf.mxu0
      %1185 = vmatprep.mubr.bf16.mxu0 %v629
      %1186 = vmatmul.mubr.bf16.gmra.mxu0 %v628
      %v1187 = vpop.f32.mrf.mxu0
      %v1188 = vadd.f32 %v1091, %v1187
      %v1189 = vpop.f32.mrf.mxu0
      %v1190 = vpop.f32.mrf.mxu0
      %v1191 = vadd.f32 %v1094, %v1190
      %v1192 = vpop.f32.mrf.mxu0
      %1193 = vdwg.mxu0
      %1194 = vmatprep.subr.bf16.mxu0 0
      %1195 = vmatpush1.bf16.msra.mxu0 %v916
      %1196 = vmatprep.subr.bf16.mxu0 0
      %1197 = vmatpush1.bf16.msra.mxu0 %v915
      %1198 = vmatprep.subr.bf16.mxu0 0
      %1199 = vmatpush1.bf16.msra.mxu0 %v914
      %1200 = vmatprep.subr.bf16.mxu0 0
      %1201 = vmatpush1.bf16.msra.mxu0 %v913
      %1202 = vmatprep.subr.bf16.mxu0 0
      %1203 = vmatpush1.bf16.msra.mxu0 %v912
      %1204 = vmatprep.subr.bf16.mxu0 0
      %1205 = vmatpush1.bf16.msra.mxu0 %v911
      %1206 = vmatprep.subr.bf16.mxu0 0
      %1207 = vmatpush1.bf16.msra.mxu0 %v910
      %1208 = vmatprep.subr.bf16.mxu0 0
      %1209 = vmatpush1.bf16.msra.mxu0 %v909
      %1210 = vmatprep.subr.bf16.mxu0 0
      %1211 = vmatpush2.bf16.msra.mxu0 %v924
      %1212 = vmatprep.subr.bf16.mxu0 0
      %1213 = vmatpush2.bf16.msra.mxu0 %v923
      %1214 = vmatprep.subr.bf16.mxu0 0
      %1215 = vmatpush2.bf16.msra.mxu0 %v922
      %1216 = vmatprep.subr.bf16.mxu0 0
      %1217 = vmatpush2.bf16.msra.mxu0 %v921
      %1218 = vmatprep.subr.bf16.mxu0 0
      %1219 = vmatpush2.bf16.msra.mxu0 %v920
      %1220 = vmatprep.subr.bf16.mxu0 0
      %1221 = vmatpush2.bf16.msra.mxu0 %v919
      %1222 = vmatprep.subr.bf16.mxu0 0
      %1223 = vmatpush2.bf16.msra.mxu0 %v918
      %1224 = vmatprep.subr.bf16.mxu0 0
      %1225 = vmatpush2.bf16.msra.mxu0 %v917
      %1226 = vmatprep.mubr.bf16.mxu0 %v582
      %1227 = vmatmul.mubr.bf16.gmra.mxu0 %v581
      %v1228 = vpop.f32.mrf.mxu0
      %v1229 = vadd.f32 %v1132, %v1228
      %v1230 = vpop.f32.mrf.mxu0
      %v1231 = vpop.f32.mrf.mxu0
      %v1232 = vadd.f32 %v1135, %v1231
      %v1233 = vpop.f32.mrf.mxu0
      %1234 = vmatprep.mubr.bf16.mxu0 %v589
      %1235 = vmatmul.mubr.bf16.gmra.mxu0 %v588
      %v1236 = vpop.f32.mrf.mxu0
      %v1237 = vadd.f32 %v1140, %v1236
      %v1238 = vpop.f32.mrf.mxu0
      %v1239 = vpop.f32.mrf.mxu0
      %v1240 = vadd.f32 %v1143, %v1239
      %v1241 = vpop.f32.mrf.mxu0
      %1242 = vmatprep.mubr.bf16.mxu0 %v596
      %1243 = vmatmul.mubr.bf16.gmra.mxu0 %v595
      %v1244 = vpop.f32.mrf.mxu0
      %v1245 = vadd.f32 %v1148, %v1244
      %v1246 = vpop.f32.mrf.mxu0
      %v1247 = vpop.f32.mrf.mxu0
      %v1248 = vadd.f32 %v1151, %v1247
      %v1249 = vpop.f32.mrf.mxu0
      %1250 = vmatprep.mubr.bf16.mxu0 %v603
      %1251 = vmatmul.mubr.bf16.gmra.mxu0 %v602
      %v1252 = vpop.f32.mrf.mxu0
      %v1253 = vadd.f32 %v1156, %v1252
      %v1254 = vpop.f32.mrf.mxu0
      %v1255 = vpop.f32.mrf.mxu0
      %v1256 = vadd.f32 %v1159, %v1255
      %v1257 = vpop.f32.mrf.mxu0
      %1258 = vmatprep.mubr.bf16.mxu0 %v610
      %1259 = vmatmul.mubr.bf16.gmra.mxu0 %v609
      %v1260 = vpop.f32.mrf.mxu0
      %v1261 = vadd.f32 %v1164, %v1260
      %v1262 = vpop.f32.mrf.mxu0
      %v1263 = vpop.f32.mrf.mxu0
      %v1264 = vadd.f32 %v1167, %v1263
      %v1265 = vpop.f32.mrf.mxu0
      %1266 = vmatprep.mubr.bf16.mxu0 %v617
      %1267 = vmatmul.mubr.bf16.gmra.mxu0 %v616
      %v1268 = vpop.f32.mrf.mxu0
      %v1269 = vadd.f32 %v1172, %v1268
      %v1270 = vpop.f32.mrf.mxu0
      %v1271 = vpop.f32.mrf.mxu0
      %v1272 = vadd.f32 %v1175, %v1271
      %v1273 = vpop.f32.mrf.mxu0
      %1274 = vmatprep.mubr.bf16.mxu0 %v624
      %1275 = vmatmul.mubr.bf16.gmra.mxu0 %v623
      %v1276 = vpop.f32.mrf.mxu0
      %v1277 = vadd.f32 %v1180, %v1276
      %v1278 = vpop.f32.mrf.mxu0
      %v1279 = vpop.f32.mrf.mxu0
      %v1280 = vadd.f32 %v1183, %v1279
      %v1281 = vpop.f32.mrf.mxu0
      %1282 = vmatprep.mubr.bf16.mxu0 %v631
      %1283 = vmatmul.mubr.bf16.gmra.mxu0 %v630
      %v1284 = vpop.f32.mrf.mxu0
      %v1285 = vadd.f32 %v1188, %v1284
      %v1286 = vpop.f32.mrf.mxu0
      %v1287 = vpop.f32.mrf.mxu0
      %v1288 = vadd.f32 %v1191, %v1287
      %v1289 = vpop.f32.mrf.mxu0
      %1290 = vdwg.mxu0
      %1291 = vmatprep.subr.bf16.mxu0 0
      %1292 = vmatpush1.bf16.msra.mxu0 0
      %1293 = vmatprep.subr.bf16.mxu0 0
      %1294 = vmatpush1.bf16.msra.mxu0 0
      %1295 = vmatprep.subr.bf16.mxu0 0
      %1296 = vmatpush1.bf16.msra.mxu0 0
      %1297 = vmatprep.subr.bf16.mxu0 0
      %1298 = vmatpush1.bf16.msra.mxu0 0
      %1299 = vmatprep.subr.bf16.mxu0 0
      %1300 = vmatpush1.bf16.msra.mxu0 0
      %1301 = vmatprep.subr.bf16.mxu0 0
      %1302 = vmatpush1.bf16.msra.mxu0 0
      %1303 = vmatprep.subr.bf16.mxu0 0
      %1304 = vmatpush1.bf16.msra.mxu0 0
      %1305 = vmatprep.subr.bf16.mxu0 0
      %1306 = vmatpush1.bf16.msra.mxu0 %v925
      %1307 = vmatprep.subr.bf16.mxu0 0
      %1308 = vmatpush2.bf16.msra.mxu0 0
      %1309 = vmatprep.subr.bf16.mxu0 0
      %1310 = vmatpush2.bf16.msra.mxu0 0
      %1311 = vmatprep.subr.bf16.mxu0 0
      %1312 = vmatpush2.bf16.msra.mxu0 0
      %1313 = vmatprep.subr.bf16.mxu0 0
      %1314 = vmatpush2.bf16.msra.mxu0 0
      %1315 = vmatprep.subr.bf16.mxu0 0
      %1316 = vmatpush2.bf16.msra.mxu0 0
      %1317 = vmatprep.subr.bf16.mxu0 0
      %1318 = vmatpush2.bf16.msra.mxu0 0
      %1319 = vmatprep.subr.bf16.mxu0 0
      %1320 = vmatpush2.bf16.msra.mxu0 0
      %1321 = vmatprep.subr.bf16.mxu0 0
      %1322 = vmatpush2.bf16.msra.mxu0 0
      %1323 = vmatprep.mubr.bf16.mxu0 0
      %1324 = vmatmul.mubr.bf16.gmra.mxu0 %v977
      %v1325 = vpop.f32.mrf.mxu0
      %v1326 = vadd.f32 %v1229, %v1325
      %v1327 = vpop.f32.mrf.mxu0
      %v1328 = vpop.f32.mrf.mxu0
      %v1329 = vadd.f32 %v1232, %v1328
      %v1330 = vpop.f32.mrf.mxu0
      %1331 = vmatprep.mubr.bf16.mxu0 0
      %1332 = vmatmul.mubr.bf16.gmra.mxu0 %v980
      %v1333 = vpop.f32.mrf.mxu0
      %v1334 = vadd.f32 %v1237, %v1333
      %v1335 = vpop.f32.mrf.mxu0
      %v1336 = vpop.f32.mrf.mxu0
      %v1337 = vadd.f32 %v1240, %v1336
      %v1338 = vpop.f32.mrf.mxu0
      %1339 = vmatprep.mubr.bf16.mxu0 0
      %1340 = vmatmul.mubr.bf16.gmra.mxu0 %v983
      %v1341 = vpop.f32.mrf.mxu0
      %v1342 = vadd.f32 %v1245, %v1341
      %v1343 = vpop.f32.mrf.mxu0
      %v1344 = vpop.f32.mrf.mxu0
      %v1345 = vadd.f32 %v1248, %v1344
      %v1346 = vpop.f32.mrf.mxu0
      %1347 = vmatprep.mubr.bf16.mxu0 0
      %1348 = vmatmul.mubr.bf16.gmra.mxu0 %v986
      %v1349 = vpop.f32.mrf.mxu0
      %v1350 = vadd.f32 %v1253, %v1349
      %v1351 = vpop.f32.mrf.mxu0
      %v1352 = vpop.f32.mrf.mxu0
      %v1353 = vadd.f32 %v1256, %v1352
      %v1354 = vpop.f32.mrf.mxu0
      %1355 = vmatprep.mubr.bf16.mxu0 0
      %1356 = vmatmul.mubr.bf16.gmra.mxu0 %v989
      %v1357 = vpop.f32.mrf.mxu0
      %v1358 = vadd.f32 %v1261, %v1357
      %v1359 = vpop.f32.mrf.mxu0
      %v1360 = vpop.f32.mrf.mxu0
      %v1361 = vadd.f32 %v1264, %v1360
      %v1362 = vpop.f32.mrf.mxu0
      %1363 = vmatprep.mubr.bf16.mxu0 0
      %1364 = vmatmul.mubr.bf16.gmra.mxu0 %v992
      %v1365 = vpop.f32.mrf.mxu0
      %v1366 = vadd.f32 %v1269, %v1365
      %v1367 = vpop.f32.mrf.mxu0
      %v1368 = vpop.f32.mrf.mxu0
      %v1369 = vadd.f32 %v1272, %v1368
      %v1370 = vpop.f32.mrf.mxu0
      %1371 = vmatprep.mubr.bf16.mxu0 0
      %1372 = vmatmul.mubr.bf16.gmra.mxu0 %v995
      %v1373 = vpop.f32.mrf.mxu0
      %v1374 = vadd.f32 %v1277, %v1373
      %v1375 = vpop.f32.mrf.mxu0
      %v1376 = vpop.f32.mrf.mxu0
      %v1377 = vadd.f32 %v1280, %v1376
      %v1378 = vpop.f32.mrf.mxu0
      %1379 = vmatprep.mubr.bf16.mxu0 0
      %1380 = vmatmul.mubr.bf16.gmra.mxu0 %v998
      %v1381 = vpop.f32.mrf.mxu0
      %v1382 = vadd.f32 %v1285, %v1381
      %v1383 = vpop.f32.mrf.mxu0
      %v1384 = vpop.f32.mrf.mxu0
      %v1385 = vadd.f32 %v1288, %v1384
      %v1386 = vpop.f32.mrf.mxu0
      %1387 = vdwg.mxu0
      %v1388 = vmax.f32 %v1326, 0.0
      %v1389 = vmax.f32 %v1329, 0.0
      %v1390 = vmax.f32 %v1334, 0.0
      %v1391 = vmax.f32 %v1337, 0.0
      %v1392 = vmax.f32 %v1342, 0.0
      %v1393 = vmax.f32 %v1345, 0.0
      %v1394 = vmax.f32 %v1350, 0.0
      %v1395 = vmax.f32 %v1353, 0.0
      %v1396 = vmax.f32 %v1358, 0.0
      %v1397 = vmax.f32 %v1361, 0.0
      %v1398 = vmax.f32 %v1366, 0.0
      %v1399 = vmax.f32 %v1369, 0.0
      %v1400 = vmax.f32 %v1374, 0.0
      %v1401 = vmax.f32 %v1377, 0.0
      %v1402 = vmax.f32 %v1382, 0.0
      %v1403 = vmax.f32 %v1385, 0.0
      %v1404 = vld [vmem:[%s3] sm:$0xff]
      %v1405 = vld [vmem:[%s3 + $0x8] sm:$0xff]
      %v1406 = vld [vmem:[%s3 + $0x10] sm:$0xff]
      %v1407 = vld [vmem:[%s3 + $0x18] sm:$0xff]
      %v1408 = vld [vmem:[%s4] sm:$0x1]
      %v1410 = vlaneseq
      %v1411 = vshrl.u32 %v1410, 7
      %v1412 = vsub.s32 0, %v1411
      %v1413 = vrot.slane %v1408, %v1412
      %vm1415 = vcmask 261120
      %v1417 = vsel %vm1415, %v1388, 0
      %v1420 = vsel %vm1415, %v1389, 0
      %v1423 = vsel %vm1415, %v1390, 0
      %v1426 = vsel %vm1415, %v1391, 0
      %v1429 = vsel %vm1415, %v1392, 0
      %v1432 = vsel %vm1415, %v1393, 0
      %v1435 = vsel %vm1415, %v1394, 0
      %v1438 = vsel %vm1415, %v1395, 0
      %v1441 = vsel %vm1415, %v1396, 0
      %v1444 = vsel %vm1415, %v1397, 0
      %v1447 = vsel %vm1415, %v1398, 0
      %v1450 = vsel %vm1415, %v1399, 0
      %v1453 = vsel %vm1415, %v1400, 0
      %v1456 = vsel %vm1415, %v1401, 0
      %v1459 = vsel %vm1415, %v1402, 0
      %v1462 = vsel %vm1415, %v1403, 0
      %1464 = vmatprep.subr.mxu0 0.0
      %1465 = vmatpush1.msra.mxu0 0.0
      %1466 = vmatprep.subr.mxu0 0.0
      %1467 = vmatpush1.msra.mxu0 0.0
      %1468 = vmatprep.subr.mxu0 0.0
      %1469 = vmatpush1.msra.mxu0 0.0
      %1470 = vmatprep.subr.mxu0 0.0
      %1471 = vmatpush1.msra.mxu0 0.0
      %1472 = vmatprep.subr.mxu0 0.0
      %1473 = vmatpush1.msra.mxu0 0.0
      %1474 = vmatprep.subr.mxu0 0.0
      %1475 = vmatpush1.msra.mxu0 0.0
      %1476 = vmatprep.subr.mxu0 0.0
      %1477 = vmatpush1.msra.mxu0 0.0
      %1478 = vmatprep.subr.mxu0 0.0
      %1479 = vmatpush1.msra.mxu0 0.0
      %1480 = vmatprep.subr.mxu0 0.0
      %1481 = vmatpush1.msra.mxu0 0.0
      %1482 = vmatprep.subr.mxu0 0.0
      %1483 = vmatpush1.msra.mxu0 0.0
      %1484 = vmatprep.subr.mxu0 0.0
      %1485 = vmatpush1.msra.mxu0 0.0
      %1486 = vmatprep.subr.mxu0 0.0
      %1487 = vmatpush1.msra.mxu0 0.0
      %1488 = vmatprep.subr.mxu0 0.0
      %1489 = vmatpush1.msra.mxu0 %v1407
      %1490 = vmatprep.subr.mxu0 0.0
      %1491 = vmatpush1.msra.mxu0 %v1406
      %1492 = vmatprep.subr.mxu0 0.0
      %1493 = vmatpush1.msra.mxu0 %v1405
      %1494 = vmatprep.subr.mxu0 0.0
      %1495 = vmatpush1.msra.mxu0 %v1404
      %1496 = vmatprep.subr.mxu0 0.0
      %1497 = vmatpush2.msra.mxu0 0.0
      %1498 = vmatprep.subr.mxu0 0.0
      %1499 = vmatpush2.msra.mxu0 0.0
      %1500 = vmatprep.subr.mxu0 0.0
      %1501 = vmatpush2.msra.mxu0 0.0
      %1502 = vmatprep.subr.mxu0 0.0
      %1503 = vmatpush2.msra.mxu0 0.0
      %1504 = vmatprep.subr.mxu0 0.0
      %1505 = vmatpush2.msra.mxu0 0.0
      %1506 = vmatprep.subr.mxu0 0.0
      %1507 = vmatpush2.msra.mxu0 0.0
      %1508 = vmatprep.subr.mxu0 0.0
      %1509 = vmatpush2.msra.mxu0 0.0
      %1510 = vmatprep.subr.mxu0 0.0
      %1511 = vmatpush2.msra.mxu0 0.0
      %1512 = vmatprep.subr.mxu0 0.0
      %1513 = vmatpush2.msra.mxu0 0.0
      %1514 = vmatprep.subr.mxu0 0.0
      %1515 = vmatpush2.msra.mxu0 0.0
      %1516 = vmatprep.subr.mxu0 0.0
      %1517 = vmatpush2.msra.mxu0 0.0
      %1518 = vmatprep.subr.mxu0 0.0
      %1519 = vmatpush2.msra.mxu0 0.0
      %1520 = vmatprep.subr.mxu0 0.0
      %1521 = vmatpush2.msra.mxu0 0.0
      %1522 = vmatprep.subr.mxu0 0.0
      %1523 = vmatpush2.msra.mxu0 0.0
      %1524 = vmatprep.subr.mxu0 0.0
      %1525 = vmatpush2.msra.mxu0 0.0
      %1526 = vmatprep.subr.mxu0 0.0
      %1527 = vmatpush2.msra.mxu0 0.0
      %1528 = vmatprep.mubr.f32.mxu0 0.0
      %1529 = vmatmul.mubr.f32.gmra.mxu0 %v1417
      %v1530 = vpop.f32.mrf.mxu0
      %v1531 = vadd.f32 %v1413, %v1530
      %v1532 = vpop.f32.mrf.mxu0
      %1533 = vmatprep.mubr.f32.mxu0 0.0
      %1534 = vmatmul.mubr.f32.gmra.mxu0 %v1420
      %v1535 = vpop.f32.mrf.mxu0
      %v1536 = vadd.f32 %v1413, %v1535
      %v1537 = vpop.f32.mrf.mxu0
      %1538 = vmatprep.mubr.f32.mxu0 0.0
      %1539 = vmatmul.mubr.f32.gmra.mxu0 %v1423
      %v1540 = vpop.f32.mrf.mxu0
      %v1541 = vadd.f32 %v1413, %v1540
      %v1542 = vpop.f32.mrf.mxu0
      %1543 = vmatprep.mubr.f32.mxu0 0.0
      %1544 = vmatmul.mubr.f32.gmra.mxu0 %v1426
      %v1545 = vpop.f32.mrf.mxu0
      %v1546 = vadd.f32 %v1413, %v1545
      %v1547 = vpop.f32.mrf.mxu0
      %1548 = vmatprep.mubr.f32.mxu0 0.0
      %1549 = vmatmul.mubr.f32.gmra.mxu0 %v1429
      %v1550 = vpop.f32.mrf.mxu0
      %v1551 = vadd.f32 %v1413, %v1550
      %v1552 = vpop.f32.mrf.mxu0
      %1553 = vmatprep.mubr.f32.mxu0 0.0
      %1554 = vmatmul.mubr.f32.gmra.mxu0 %v1432
      %v1555 = vpop.f32.mrf.mxu0
      %v1556 = vadd.f32 %v1413, %v1555
      %v1557 = vpop.f32.mrf.mxu0
      %1558 = vmatprep.mubr.f32.mxu0 0.0
      %1559 = vmatmul.mubr.f32.gmra.mxu0 %v1435
      %v1560 = vpop.f32.mrf.mxu0
      %v1561 = vadd.f32 %v1413, %v1560
      %v1562 = vpop.f32.mrf.mxu0
      %1563 = vmatprep.mubr.f32.mxu0 0.0
      %1564 = vmatmul.mubr.f32.gmra.mxu0 %v1438
      %v1565 = vpop.f32.mrf.mxu0
      %v1566 = vadd.f32 %v1413, %v1565
      %v1567 = vpop.f32.mrf.mxu0
      %1568 = vmatprep.mubr.f32.mxu0 0.0
      %1569 = vmatmul.mubr.f32.gmra.mxu0 %v1441
      %v1570 = vpop.f32.mrf.mxu0
      %v1571 = vadd.f32 %v1413, %v1570
      %v1572 = vpop.f32.mrf.mxu0
      %1573 = vmatprep.mubr.f32.mxu0 0.0
      %1574 = vmatmul.mubr.f32.gmra.mxu0 %v1444
      %v1575 = vpop.f32.mrf.mxu0
      %v1576 = vadd.f32 %v1413, %v1575
      %v1577 = vpop.f32.mrf.mxu0
      %1578 = vmatprep.mubr.f32.mxu0 0.0
      %1579 = vmatmul.mubr.f32.gmra.mxu0 %v1447
      %v1580 = vpop.f32.mrf.mxu0
      %v1581 = vadd.f32 %v1413, %v1580
      %v1582 = vpop.f32.mrf.mxu0
      %1583 = vmatprep.mubr.f32.mxu0 0.0
      %1584 = vmatmul.mubr.f32.gmra.mxu0 %v1450
      %v1585 = vpop.f32.mrf.mxu0
      %v1586 = vadd.f32 %v1413, %v1585
      %v1587 = vpop.f32.mrf.mxu0
      %1588 = vmatprep.mubr.f32.mxu0 0.0
      %1589 = vmatmul.mubr.f32.gmra.mxu0 %v1453
      %v1590 = vpop.f32.mrf.mxu0
      %v1591 = vadd.f32 %v1413, %v1590
      %v1592 = vpop.f32.mrf.mxu0
      %1593 = vmatprep.mubr.f32.mxu0 0.0
      %1594 = vmatmul.mubr.f32.gmra.mxu0 %v1456
      %v1595 = vpop.f32.mrf.mxu0
      %v1596 = vadd.f32 %v1413, %v1595
      %v1597 = vpop.f32.mrf.mxu0
      %1598 = vmatprep.mubr.f32.mxu0 0.0
      %1599 = vmatmul.mubr.f32.gmra.mxu0 %v1459
      %v1600 = vpop.f32.mrf.mxu0
      %v1601 = vadd.f32 %v1413, %v1600
      %v1602 = vpop.f32.mrf.mxu0
      %1603 = vmatprep.mubr.f32.mxu0 0.0
      %1604 = vmatmul.mubr.f32.gmra.mxu0 %v1462
      %v1605 = vpop.f32.mrf.mxu0
      %v1606 = vadd.f32 %v1413, %v1605
      %v1607 = vpop.f32.mrf.mxu0
      %1608 = vdwg.mxu0
      %1609 = vmax.xlane.f32.xlu0 %v1531
      %v1610 = vpop.xlane.xlu0 %1609
      %1611 = vmax.xlane.f32.xlu0 %v1536
      %v1612 = vpop.xlane.xlu0 %1611
      %1613 = vmax.xlane.f32.xlu0 %v1541
      %v1614 = vpop.xlane.xlu0 %1613
      %1615 = vmax.xlane.f32.xlu0 %v1546
      %v1616 = vpop.xlane.xlu0 %1615
      %1617 = vmax.xlane.f32.xlu0 %v1551
      %v1618 = vpop.xlane.xlu0 %1617
      %1619 = vmax.xlane.f32.xlu0 %v1556
      %v1620 = vpop.xlane.xlu0 %1619
      %1621 = vmax.xlane.f32.xlu0 %v1561
      %v1622 = vpop.xlane.xlu0 %1621
      %1623 = vmax.xlane.f32.xlu0 %v1566
      %v1624 = vpop.xlane.xlu0 %1623
      %1625 = vmax.xlane.f32.xlu0 %v1571
      %v1626 = vpop.xlane.xlu0 %1625
      %1627 = vmax.xlane.f32.xlu0 %v1576
      %v1628 = vpop.xlane.xlu0 %1627
      %1629 = vmax.xlane.f32.xlu0 %v1581
      %v1630 = vpop.xlane.xlu0 %1629
      %1631 = vmax.xlane.f32.xlu0 %v1586
      %v1632 = vpop.xlane.xlu0 %1631
      %1633 = vmax.xlane.f32.xlu0 %v1591
      %v1634 = vpop.xlane.xlu0 %1633
      %1635 = vmax.xlane.f32.xlu0 %v1596
      %v1636 = vpop.xlane.xlu0 %1635
      %1637 = vmax.xlane.f32.xlu0 %v1601
      %v1638 = vpop.xlane.xlu0 %1637
      %1639 = vmax.xlane.f32.xlu0 %v1606
      %v1640 = vpop.xlane.xlu0 %1639
      %v1641 = vsub.f32 %v1531, %v1610
      %v1642 = vsub.f32 %v1536, %v1612
      %v1643 = vsub.f32 %v1541, %v1614
      %v1644 = vsub.f32 %v1546, %v1616
      %v1645 = vsub.f32 %v1551, %v1618
      %v1646 = vsub.f32 %v1556, %v1620
      %v1647 = vsub.f32 %v1561, %v1622
      %v1648 = vsub.f32 %v1566, %v1624
      %v1649 = vsub.f32 %v1571, %v1626
      %v1650 = vsub.f32 %v1576, %v1628
      %v1651 = vsub.f32 %v1581, %v1630
      %v1652 = vsub.f32 %v1586, %v1632
      %v1653 = vsub.f32 %v1591, %v1634
      %v1654 = vsub.f32 %v1596, %v1636
      %v1655 = vsub.f32 %v1601, %v1638
      %v1656 = vsub.f32 %v1606, %v1640
      %v1657 = vmul.f32 %v1641, 1.442695
      %v1658 = vpow.pop %v1657
      %v1659 = vmul.f32 %v1642, 1.442695
      %v1660 = vpow.pop %v1659
      %v1661 = vmul.f32 %v1643, 1.442695
      %v1662 = vpow.pop %v1661
      %v1663 = vmul.f32 %v1644, 1.442695
      %v1664 = vpow.pop %v1663
      %v1665 = vmul.f32 %v1645, 1.442695
      %v1666 = vpow.pop %v1665
      %v1667 = vmul.f32 %v1646, 1.442695
      %v1668 = vpow.pop %v1667
      %v1669 = vmul.f32 %v1647, 1.442695
      %v1670 = vpow.pop %v1669
      %v1671 = vmul.f32 %v1648, 1.442695
      %v1672 = vpow.pop %v1671
      %v1673 = vmul.f32 %v1649, 1.442695
      %v1674 = vpow.pop %v1673
      %v1675 = vmul.f32 %v1650, 1.442695
      %v1676 = vpow.pop %v1675
      %v1677 = vmul.f32 %v1651, 1.442695
      %v1678 = vpow.pop %v1677
      %v1679 = vmul.f32 %v1652, 1.442695
      %v1680 = vpow.pop %v1679
      %v1681 = vmul.f32 %v1653, 1.442695
      %v1682 = vpow.pop %v1681
      %v1683 = vmul.f32 %v1654, 1.442695
      %v1684 = vpow.pop %v1683
      %v1685 = vmul.f32 %v1655, 1.442695
      %v1686 = vpow.pop %v1685
      %v1687 = vmul.f32 %v1656, 1.442695
      %v1688 = vpow.pop %v1687
      %1689 = vadd.xlane.f32.xlu0 %v1658
      %v1690 = vpop.xlane.xlu0 %1689
      %1691 = vadd.xlane.f32.xlu0 %v1660
      %v1692 = vpop.xlane.xlu0 %1691
      %1693 = vadd.xlane.f32.xlu0 %v1662
      %v1694 = vpop.xlane.xlu0 %1693
      %1695 = vadd.xlane.f32.xlu0 %v1664
      %v1696 = vpop.xlane.xlu0 %1695
      %1697 = vadd.xlane.f32.xlu0 %v1666
      %v1698 = vpop.xlane.xlu0 %1697
      %1699 = vadd.xlane.f32.xlu0 %v1668
      %v1700 = vpop.xlane.xlu0 %1699
      %1701 = vadd.xlane.f32.xlu0 %v1670
      %v1702 = vpop.xlane.xlu0 %1701
      %1703 = vadd.xlane.f32.xlu0 %v1672
      %v1704 = vpop.xlane.xlu0 %1703
      %1705 = vadd.xlane.f32.xlu0 %v1674
      %v1706 = vpop.xlane.xlu0 %1705
      %1707 = vadd.xlane.f32.xlu0 %v1676
      %v1708 = vpop.xlane.xlu0 %1707
      %1709 = vadd.xlane.f32.xlu0 %v1678
      %v1710 = vpop.xlane.xlu0 %1709
      %1711 = vadd.xlane.f32.xlu0 %v1680
      %v1712 = vpop.xlane.xlu0 %1711
      %1713 = vadd.xlane.f32.xlu0 %v1682
      %v1714 = vpop.xlane.xlu0 %1713
      %1715 = vadd.xlane.f32.xlu0 %v1684
      %v1716 = vpop.xlane.xlu0 %1715
      %1717 = vadd.xlane.f32.xlu0 %v1686
      %v1718 = vpop.xlane.xlu0 %1717
      %1719 = vadd.xlane.f32.xlu0 %v1688
      %v1720 = vpop.xlane.xlu0 %1719
      %v1721 = vrcp.pop %v1690
      %v1722 = vrcp.pop %v1692
      %v1723 = vrcp.pop %v1694
      %v1724 = vrcp.pop %v1696
      %v1725 = vrcp.pop %v1698
      %v1726 = vrcp.pop %v1700
      %v1727 = vrcp.pop %v1702
      %v1728 = vrcp.pop %v1704
      %v1729 = vrcp.pop %v1706
      %v1730 = vrcp.pop %v1708
      %v1731 = vrcp.pop %v1710
      %v1732 = vrcp.pop %v1712
      %v1733 = vrcp.pop %v1714
      %v1734 = vrcp.pop %v1716
      %v1735 = vrcp.pop %v1718
      %v1736 = vrcp.pop %v1720
      %v1737 = vmul.f32 %v1658, %v1721
      %v1738 = vmul.f32 %v1660, %v1722
      %v1739 = vmul.f32 %v1662, %v1723
      %v1740 = vmul.f32 %v1664, %v1724
      %v1741 = vmul.f32 %v1666, %v1725
      %v1742 = vmul.f32 %v1668, %v1726
      %v1743 = vmul.f32 %v1670, %v1727
      %v1744 = vmul.f32 %v1672, %v1728
      %v1745 = vmul.f32 %v1674, %v1729
      %v1746 = vmul.f32 %v1676, %v1730
      %v1747 = vmul.f32 %v1678, %v1731
      %v1748 = vmul.f32 %v1680, %v1732
      %v1749 = vmul.f32 %v1682, %v1733
      %v1750 = vmul.f32 %v1684, %v1734
      %v1751 = vmul.f32 %v1686, %v1735
      %v1752 = vmul.f32 %v1688, %v1736
      %1753 = vst [vmem:[%s229] sm:$0xff] %v1737
      %1754 = vst [vmem:[%s229 + $0x8] sm:$0xff] %v1738
      %1755 = vst [vmem:[%s229 + $0x10] sm:$0xff] %v1739
      %1756 = vst [vmem:[%s229 + $0x18] sm:$0xff] %v1740
      %1757 = vst [vmem:[%s229 + $0x20] sm:$0xff] %v1741
      %1758 = vst [vmem:[%s229 + $0x28] sm:$0xff] %v1742
      %1759 = vst [vmem:[%s229 + $0x30] sm:$0xff] %v1743
      %1760 = vst [vmem:[%s229 + $0x38] sm:$0xff] %v1744
      %1761 = vst [vmem:[%s229 + $0x40] sm:$0xff] %v1745
      %1762 = vst [vmem:[%s229 + $0x48] sm:$0xff] %v1746
      %1763 = vst [vmem:[%s229 + $0x50] sm:$0xff] %v1747
      %1764 = vst [vmem:[%s229 + $0x58] sm:$0xff] %v1748
      %1765 = vst [vmem:[%s229 + $0x60] sm:$0xff] %v1749
      %1766 = vst [vmem:[%s229 + $0x68] sm:$0xff] %v1750
      %1767 = vst [vmem:[%s229 + $0x70] sm:$0xff] %v1751
      %1768 = vst [vmem:[%s229 + $0x78] sm:$0xff] %v1752
      %s1769 = smul.u32 16, %s16
      %p1770 = scmp.lt.s32.totalorder %s1769, 31
      %s1771 = scalar_select %p1770, %s1769, 31
      %s1772 = smul.addr %s1771, 8
      %s1773 = scalar_lea.vmem %s5, %s1772
      // Predicated region
      $region41: #{model_2_forward.1} parent=39 // pred_check
        %p1774 = pneg %p144
      $region42: #{model_2_forward.1} parent=39 // pred_check_branch
        %1776 = sbr.rel (%p1774) target = $region44
      $region43: #{model_2_forward.1} parent=39 // pred_region
        %s1777 = smul.u32 16, %s16
      $region44: #{model_2_forward.1} parent=39 // pred_fallthru
        _
    $region40: #{model_2_forward.1} parent=5 // pred_fallthru
      _
    %p1778 = scmp.le.s32.totalorder 2, %s11
    // Predicated region
    $region45: #{model_2_forward.1} parent=5 // pred_check
      %p1779 = pneg %p1778
    $region46: #{model_2_forward.1} parent=5 // pred_check_branch
      %1781 = sbr.rel (%p1779) target = $region48
    $region47: #{model_2_forward.1} parent=5 // pred_region
      %s1782 = ssub.s32 %s11, 2
      // Predicated region
      $region49: #{model_2_forward.1} parent=47 // pred_check
        %p1783 = pneg %p150
      $region50: #{model_2_forward.1} parent=47 // pred_check_branch
        %1785 = sbr.rel (%p1783) target = $region52
      $region51: #{model_2_forward.1} parent=47 // pred_region
        %s1786 = smul.u32 16, %s17
        %p1787 = scmp.lt.s32.totalorder %s1786, 31
        %s1788 = scalar_select %p1787, %s1786, 31
        %s1789 = smul.addr %s1788, 8
        %s1790 = scalar_lea.vmem %s5, %s1789
      $region52: #{model_2_forward.1} parent=47 // pred_fallthru
        _
    $region48: #{model_2_forward.1} parent=5 // pred_fallthru
      _
  $region6: #{model_2_forward.1} parent=0 // loop_footer
    %s15 = sadd.s32 1, %s11
  $region7: #{model_2_forward.1} parent=0 // loop_footer_branch
    %10 = sbr.rel target = $region3
  $region8: #{model_2_forward.1} parent=0 // loop_exit
    _

</llo_original>
